<compile_context>
chip_gen: v5e
topology: v5e:2x2
jax: 0.10.0
libtpu: 0.0.40
codegen_flags: <defaults>
</compile_context>

<pallas_src>
import functools

import numpy as np
import jax
import jax.numpy as jnp
from jax import lax
from jax.experimental import pallas as pl
from jax.experimental.pallas import tpu as pltpu


# ----------------------------------------------------------------------------
# Static relative-position index (numpy, matches the PyTorch buffer)
# ----------------------------------------------------------------------------
def _relative_position_index(ws):
    coords = np.stack(np.meshgrid(np.arange(ws), np.arange(ws), indexing="ij"))
    coords_flatten = coords.reshape(2, -1)
    rel = coords_flatten[:, :, None] - coords_flatten[:, None, :]
    rel = rel.transpose(1, 2, 0).copy()
    rel[:, :, 0] += ws - 1
    rel[:, :, 1] += ws - 1
    rel[:, :, 0] *= 2 * ws - 1
    return rel.sum(-1)  # (ws*ws, ws*ws)


# ----------------------------------------------------------------------------
# Fused Pallas kernel: QKV proj -> window attention -> output proj
# ----------------------------------------------------------------------------
def _fused_window_attention_kernel(
    x_ref,        # (1, ws, n_w, hidden)          current row-of-windows
    w_qkv_ref,    # (hidden, 3*inner)             resident
    bias_ref,     # (heads, ws2, ws2) f32         resident (post-softmax bias)
    w_out_ref,    # (inner, hidden)               resident
    b_out_ref,    # (1, hidden)                   resident
    o_ref,        # (1, ws, n_w, hidden)          output tile (lane-dense)
    qkv_s,        # VMEM scratch (nw_w, ws2, 3*inner)
    *, ws, nw_w, heads, head_dim, scale):
  ws2 = ws * ws
  inner = heads * head_dim
  hidden = o_ref.shape[-1]

  w_qkv = w_qkv_ref[...]
  w_out = w_out_ref[...]
  b_out = b_out_ref[...].astype(jnp.float32)
  bias = bias_ref[...]

  # ---- Phase 1: QKV projection for all tokens of this row of windows.
  # One MXU matmul per spatial row (M = n_w), scattered directly into the
  # window-major scratch layout (no value reshapes needed).
  for r in range(ws):
      row = x_ref[0, r, :, :]                                    # (n_w, hidden)
      qkv_row = jnp.dot(row, w_qkv,
                        preferred_element_type=jnp.float32).astype(qkv_s.dtype)
      for w in range(nw_w):
          qkv_s[w, r * ws:(r + 1) * ws, :] = qkv_row[w * ws:(w + 1) * ws, :]

  # ---- Phase 2: per-window attention + fused output projection.
  for w in range(nw_w):
      xw = qkv_s[w]                                              # (ws2, 3*inner)
      acc = jnp.zeros((ws2, hidden), jnp.float32)
      for h in range(heads):
          base = h * head_dim
          qh = xw[:, base:base + head_dim] * scale               # scale folded into Q
          kh = xw[:, inner + base:inner + base + head_dim]
          vh = xw[:, 2 * inner + base:2 * inner + base + head_dim]

          # Q @ K^T on the MXU (contract the head_dim axis of both operands).
          dots = lax.dot_general(qh, kh, (((1,), (1,)), ((), ())),
                                 preferred_element_type=jnp.float32)  # (ws2, ws2)
          m = jnp.max(dots, axis=-1, keepdims=True)
          e = jnp.exp(dots - m)
          denom = jnp.sum(e, axis=-1, keepdims=True)
          # softmax, then bias added AFTER softmax (matches the reference).
          attn = e * pl.reciprocal(denom, approx=False) + bias[h]

          pv = jnp.dot(attn.astype(vh.dtype), vh,
                       preferred_element_type=jnp.float32)            # (ws2, head_dim)
          # Fused output projection: concat_h(pv_h) @ w_out
          #   == sum_h pv_h @ w_out[h*hd:(h+1)*hd, :]
          acc = acc + jnp.dot(pv.astype(w_out.dtype),
                              w_out[base:base + head_dim, :],
                              preferred_element_type=jnp.float32)

      y = (acc + b_out).astype(o_ref.dtype)                           # (ws2, hidden)
      # Scatter the ws2 window tokens back to their spatial positions.
      for r in range(ws):
          o_ref[0, r, w * ws:(w + 1) * ws, :] = y[r * ws:(r + 1) * ws, :]


# ----------------------------------------------------------------------------
# Forward (Pallas)
# ----------------------------------------------------------------------------
def window_attention_forward(x, w_qkv, w_out, b_out, rel_table,
                             heads, head_dim, window_size):
    B, n_h, n_w, hidden = x.shape
    ws = window_size
    assert n_h % ws == 0 and n_w % ws == 0
    ws2 = ws * ws
    nw_h, nw_w = n_h // ws, n_w // ws
    inner = heads * head_dim
    scale = head_dim ** (-0.5)

    # Relative-position bias (tiny static gather in plain JAX; f32 so the
    # kernel never has to cast it).
    rel_idx = _relative_position_index(ws)
    bias = rel_table[rel_idx.reshape(-1)].reshape(ws2, ws2, heads)
    bias = jnp.transpose(bias, (2, 0, 1)).astype(jnp.float32)   # (heads, ws2, ws2)

    b_out2 = b_out.reshape(1, hidden)

    kernel = functools.partial(
        _fused_window_attention_kernel,
        ws=ws, nw_w=nw_w, heads=heads, head_dim=head_dim, scale=scale)

    n_tok = B * n_h * n_w
    flops = (2 * n_tok * hidden * 3 * inner          # qkv projection
             + 4 * n_tok * ws2 * heads * head_dim    # QK^T and PV
             + 2 * n_tok * inner * hidden)           # output projection
    itemsize = x.dtype.itemsize
    bytes_accessed = (2 * x.size * itemsize
                      + (w_qkv.size + w_out.size + b_out.size) * w_qkv.dtype.itemsize
                      + bias.size * 4)

    out = pl.pallas_call(
        kernel,
        out_shape=jax.ShapeDtypeStruct((B, n_h, n_w, hidden), x.dtype),
        grid=(B, nw_h),
        in_specs=[
            pl.BlockSpec((1, ws, n_w, hidden), lambda b, r: (b, r, 0, 0)),
            pl.BlockSpec((hidden, 3 * inner), lambda b, r: (0, 0)),
            pl.BlockSpec((heads, ws2, ws2), lambda b, r: (0, 0, 0)),
            pl.BlockSpec((inner, hidden), lambda b, r: (0, 0)),
            pl.BlockSpec((1, hidden), lambda b, r: (0, 0)),
        ],
        out_specs=pl.BlockSpec((1, ws, n_w, hidden), lambda b, r: (b, r, 0, 0)),
        scratch_shapes=[pltpu.VMEM((nw_w, ws2, 3 * inner), x.dtype)],
        compiler_params=pltpu.CompilerParams(
            dimension_semantics=("parallel", "parallel"),
            vmem_limit_bytes=32 * 1024 * 1024),
        cost_estimate=pl.CostEstimate(
            flops=int(flops),
            transcendentals=int(n_tok * heads * ws2),
            bytes_accessed=int(bytes_accessed)),
    )(x, w_qkv, bias, w_out, b_out2)
    return out


# ----------------------------------------------------------------------------
# Pure-JAX reference (mirrors the PyTorch code) for correctness checking
# ----------------------------------------------------------------------------
def reference_forward(x, w_qkv, w_out, b_out, rel_table,
                      heads, head_dim, window_size):
    B, n_h, n_w, hidden = x.shape
    ws = window_size
    ws2 = ws * ws
    nw_h, nw_w = n_h // ws, n_w // ws
    inner = heads * head_dim
    scale = head_dim ** (-0.5)

    qkv = x @ w_qkv
    q, k, v = jnp.split(qkv, 3, axis=-1)

    def rearr(t):
        t = t.reshape(B, nw_h, ws, nw_w, ws, heads, head_dim)
        t = t.transpose(0, 5, 1, 3, 2, 4, 6)
        return t.reshape(B, heads, nw_h * nw_w, ws2, head_dim)

    q, k, v = map(rearr, (q, k, v))
    dots = jnp.einsum("bhwid,bhwjd->bhwij", q, k) * scale
    attn = jax.nn.softmax(dots, axis=-1)

    rel_idx = _relative_position_index(ws)
    bias = rel_table[rel_idx.reshape(-1)].reshape(ws2, ws2, heads)
    bias = jnp.transpose(bias, (2, 0, 1))                 # (h, i, j)
    attn = attn + bias[None, :, None]                     # post-softmax bias

    out = jnp.einsum("bhwij,bhwjd->bhwid", attn, v)
    out = out.reshape(B, heads, nw_h, nw_w, ws, ws, head_dim)
    out = out.transpose(0, 2, 4, 3, 5, 1, 6).reshape(B, n_h, n_w, inner)
    return out @ w_out + b_out


# ----------------------------------------------------------------------------
if __name__ == "__main__":
    # Small shapes consistent with the module's forward.
    B, n_h, n_w = 2, 8, 8
    hidden_dim, heads, head_dim, window_size = 32, 2, 16, 4
    inner = heads * head_dim

    key = jax.random.PRNGKey(0)
    k1, k2, k3, k4, k5 = jax.random.split(key, 5)
    x = jax.random.normal(k1, (B, n_h, n_w, hidden_dim), jnp.float32)

    # Deterministic synthetic parameters (torch stores Linear weight as
    # (out, in); we keep them as (in, out)).
    w_qkv = jax.random.normal(k2, (hidden_dim, inner * 3), jnp.float32) * 0.05
    w_out = jax.random.normal(k3, (inner, hidden_dim), jnp.float32) * 0.05
    b_out = jax.random.normal(k4, (hidden_dim,), jnp.float32) * 0.05
    rel_table = jax.random.normal(
        k5, ((2 * window_size - 1) * (2 * window_size - 1), heads), jnp.float32
    ) * 0.02

    y = window_attention_forward(
        x, w_qkv, w_out, b_out, rel_table, heads, head_dim, window_size)
    y = jax.block_until_ready(y)

    y_ref = reference_forward(
        x, w_qkv, w_out, b_out, rel_table, heads, head_dim, window_size)
    y_ref = jax.block_until_ready(y_ref)

    assert y.shape == (B, n_h, n_w, hidden_dim)
    np.testing.assert_allclose(np.asarray(y), np.asarray(y_ref),
                               rtol=1e-4, atol=1e-4)
    print("KERNEL_OK")
</pallas_src>

<mosaic_0001>
module attributes {stable_mosaic.version = 11 : i64} {
  func.func @_fused_window_attention_kernel(%arg0: i32, %arg1: i32, %arg2: memref<1x4x8x32xf32, #tpu.memory_space<vmem>>, %arg3: memref<32x96xf32, #tpu.memory_space<vmem>>, %arg4: memref<2x16x16xf32, #tpu.memory_space<vmem>>, %arg5: memref<32x32xf32, #tpu.memory_space<vmem>>, %arg6: memref<1x32xf32, #tpu.memory_space<vmem>>, %arg7: memref<1x4x8x32xf32, #tpu.memory_space<vmem>>, %arg8: memref<2x16x96xf32, #tpu.memory_space<vmem>>) attributes {dimension_semantics = [#tpu.dimension_semantics<parallel>, #tpu.dimension_semantics<parallel>], iteration_bounds = array<i64: 2, 2>, scalar_prefetch = 0 : i64, scratch_operands = 1 : i64, tpu.core_type = #tpu.core_type<tc>, window_params = [{transform_indices = @transform_0, window_bounds = array<i64: 1, 4, 8, 32>}, {pipeline_mode = #tpu.pipeline_mode<synchronous>, transform_indices = @transform_1, window_bounds = array<i64: 32, 96>}, {pipeline_mode = #tpu.pipeline_mode<synchronous>, transform_indices = @transform_2, window_bounds = array<i64: 2, 16, 16>}, {pipeline_mode = #tpu.pipeline_mode<synchronous>, transform_indices = @transform_3, window_bounds = array<i64: 32, 32>}, {pipeline_mode = #tpu.pipeline_mode<synchronous>, transform_indices = @transform_4, window_bounds = array<i64: 1, 32>}, {transform_indices = @transform_5, window_bounds = array<i64: 1, 4, 8, 32>}]} {
    %c0 = arith.constant 0 : index
    %c0_0 = arith.constant 0 : index
    %0 = vector.load %arg3[%c0, %c0_0] : memref<32x96xf32, #tpu.memory_space<vmem>>, vector<32x96xf32>
    %c0_1 = arith.constant 0 : index
    %c0_2 = arith.constant 0 : index
    %1 = vector.load %arg5[%c0_1, %c0_2] : memref<32x32xf32, #tpu.memory_space<vmem>>, vector<32x32xf32>
    %c0_3 = arith.constant 0 : index
    %c0_4 = arith.constant 0 : index
    %2 = vector.load %arg6[%c0_3, %c0_4] : memref<1x32xf32, #tpu.memory_space<vmem>>, vector<1x32xf32>
    %c0_5 = arith.constant 0 : index
    %c0_6 = arith.constant 0 : index
    %c0_7 = arith.constant 0 : index
    %3 = vector.load %arg4[%c0_5, %c0_6, %c0_7] : memref<2x16x16xf32, #tpu.memory_space<vmem>>, vector<2x16x16xf32>
    %c0_8 = arith.constant 0 : index
    %c0_9 = arith.constant 0 : index
    %c0_10 = arith.constant 0 : index
    %c0_11 = arith.constant 0 : index
    %4 = vector.load %arg2[%c0_8, %c0_9, %c0_10, %c0_11] : memref<1x4x8x32xf32, #tpu.memory_space<vmem>>, vector<1x1x8x32xf32>
    %5 = vector.shape_cast %4 : vector<1x1x8x32xf32> to vector<8x32xf32>
    %cst = arith.constant dense<0.000000e+00> : vector<8x96xf32>
    %6 = tpu.matmul %5, %0, %cst {dimension_numbers = #tpu.dot_dimension_numbers<[1], [0], [0], [1], [0, 0, 1, 1], [], []>} : vector<8x32xf32>, vector<32x96xf32>, vector<8x96xf32> -> vector<8x96xf32>
    %7 = vector.extract_strided_slice %6 {offsets = [0, 0], sizes = [4, 96], strides = [1, 1]} : vector<8x96xf32> to vector<4x96xf32>
    %c0_12 = arith.constant 0 : index
    %c0_13 = arith.constant 0 : index
    %c0_14 = arith.constant 0 : index
    %8 = vector.load %arg8[%c0_12, %c0_13, %c0_14] : memref<2x16x96xf32, #tpu.memory_space<vmem>>, vector<1x4x96xf32>
    %9 = vector.shape_cast %8 : vector<1x4x96xf32> to vector<4x96xf32>
    %10 = vector.shape_cast %7 : vector<4x96xf32> to vector<1x4x96xf32>
    tpu.vector_store %arg8[%c0_12, %c0_13, %c0_14], %10 {strides = array<i32>} : memref<2x16x96xf32, #tpu.memory_space<vmem>>, vector<1x4x96xf32>,
    %11 = vector.extract_strided_slice %6 {offsets = [4, 0], sizes = [4, 96], strides = [1, 1]} : vector<8x96xf32> to vector<4x96xf32>
    %c1 = arith.constant 1 : index
    %c0_15 = arith.constant 0 : index
    %c0_16 = arith.constant 0 : index
    %12 = vector.load %arg8[%c1, %c0_15, %c0_16] : memref<2x16x96xf32, #tpu.memory_space<vmem>>, vector<1x4x96xf32>
    %13 = vector.shape_cast %12 : vector<1x4x96xf32> to vector<4x96xf32>
    %14 = vector.shape_cast %11 : vector<4x96xf32> to vector<1x4x96xf32>
    tpu.vector_store %arg8[%c1, %c0_15, %c0_16], %14 {strides = array<i32>} : memref<2x16x96xf32, #tpu.memory_space<vmem>>, vector<1x4x96xf32>,
    %c0_17 = arith.constant 0 : index
    %c1_18 = arith.constant 1 : index
    %c0_19 = arith.constant 0 : index
    %c0_20 = arith.constant 0 : index
    %15 = vector.load %arg2[%c0_17, %c1_18, %c0_19, %c0_20] : memref<1x4x8x32xf32, #tpu.memory_space<vmem>>, vector<1x1x8x32xf32>
    %16 = vector.shape_cast %15 : vector<1x1x8x32xf32> to vector<8x32xf32>
    %cst_21 = arith.constant dense<0.000000e+00> : vector<8x96xf32>
    %17 = tpu.matmul %16, %0, %cst_21 {dimension_numbers = #tpu.dot_dimension_numbers<[1], [0], [0], [1], [0, 0, 1, 1], [], []>} : vector<8x32xf32>, vector<32x96xf32>, vector<8x96xf32> -> vector<8x96xf32>
    %18 = vector.extract_strided_slice %17 {offsets = [0, 0], sizes = [4, 96], strides = [1, 1]} : vector<8x96xf32> to vector<4x96xf32>
    %c0_22 = arith.constant 0 : index
    %c4 = arith.constant 4 : index
    %c0_23 = arith.constant 0 : index
    %19 = vector.load %arg8[%c0_22, %c4, %c0_23] : memref<2x16x96xf32, #tpu.memory_space<vmem>>, vector<1x4x96xf32>
    %20 = vector.shape_cast %19 : vector<1x4x96xf32> to vector<4x96xf32>
    %21 = vector.shape_cast %18 : vector<4x96xf32> to vector<1x4x96xf32>
    tpu.vector_store %arg8[%c0_22, %c4, %c0_23], %21 {strides = array<i32>} : memref<2x16x96xf32, #tpu.memory_space<vmem>>, vector<1x4x96xf32>,
    %22 = vector.extract_strided_slice %17 {offsets = [4, 0], sizes = [4, 96], strides = [1, 1]} : vector<8x96xf32> to vector<4x96xf32>
    %c1_24 = arith.constant 1 : index
    %c4_25 = arith.constant 4 : index
    %c0_26 = arith.constant 0 : index
    %23 = vector.load %arg8[%c1_24, %c4_25, %c0_26] : memref<2x16x96xf32, #tpu.memory_space<vmem>>, vector<1x4x96xf32>
    %24 = vector.shape_cast %23 : vector<1x4x96xf32> to vector<4x96xf32>
    %25 = vector.shape_cast %22 : vector<4x96xf32> to vector<1x4x96xf32>
    tpu.vector_store %arg8[%c1_24, %c4_25, %c0_26], %25 {strides = array<i32>} : memref<2x16x96xf32, #tpu.memory_space<vmem>>, vector<1x4x96xf32>,
    %c0_27 = arith.constant 0 : index
    %c2 = arith.constant 2 : index
    %c0_28 = arith.constant 0 : index
    %c0_29 = arith.constant 0 : index
    %26 = vector.load %arg2[%c0_27, %c2, %c0_28, %c0_29] : memref<1x4x8x32xf32, #tpu.memory_space<vmem>>, vector<1x1x8x32xf32>
    %27 = vector.shape_cast %26 : vector<1x1x8x32xf32> to vector<8x32xf32>
    %cst_30 = arith.constant dense<0.000000e+00> : vector<8x96xf32>
    %28 = tpu.matmul %27, %0, %cst_30 {dimension_numbers = #tpu.dot_dimension_numbers<[1], [0], [0], [1], [0, 0, 1, 1], [], []>} : vector<8x32xf32>, vector<32x96xf32>, vector<8x96xf32> -> vector<8x96xf32>
    %29 = vector.extract_strided_slice %28 {offsets = [0, 0], sizes = [4, 96], strides = [1, 1]} : vector<8x96xf32> to vector<4x96xf32>
    %c0_31 = arith.constant 0 : index
    %c8 = arith.constant 8 : index
    %c0_32 = arith.constant 0 : index
    %30 = vector.load %arg8[%c0_31, %c8, %c0_32] : memref<2x16x96xf32, #tpu.memory_space<vmem>>, vector<1x4x96xf32>
    %31 = vector.shape_cast %30 : vector<1x4x96xf32> to vector<4x96xf32>
    %32 = vector.shape_cast %29 : vector<4x96xf32> to vector<1x4x96xf32>
    tpu.vector_store %arg8[%c0_31, %c8, %c0_32], %32 {strides = array<i32>} : memref<2x16x96xf32, #tpu.memory_space<vmem>>, vector<1x4x96xf32>,
    %33 = vector.extract_strided_slice %28 {offsets = [4, 0], sizes = [4, 96], strides = [1, 1]} : vector<8x96xf32> to vector<4x96xf32>
    %c1_33 = arith.constant 1 : index
    %c8_34 = arith.constant 8 : index
    %c0_35 = arith.constant 0 : index
    %34 = vector.load %arg8[%c1_33, %c8_34, %c0_35] : memref<2x16x96xf32, #tpu.memory_space<vmem>>, vector<1x4x96xf32>
    %35 = vector.shape_cast %34 : vector<1x4x96xf32> to vector<4x96xf32>
    %36 = vector.shape_cast %33 : vector<4x96xf32> to vector<1x4x96xf32>
    tpu.vector_store %arg8[%c1_33, %c8_34, %c0_35], %36 {strides = array<i32>} : memref<2x16x96xf32, #tpu.memory_space<vmem>>, vector<1x4x96xf32>,
    %c0_36 = arith.constant 0 : index
    %c3 = arith.constant 3 : index
    %c0_37 = arith.constant 0 : index
    %c0_38 = arith.constant 0 : index
    %37 = vector.load %arg2[%c0_36, %c3, %c0_37, %c0_38] : memref<1x4x8x32xf32, #tpu.memory_space<vmem>>, vector<1x1x8x32xf32>
    %38 = vector.shape_cast %37 : vector<1x1x8x32xf32> to vector<8x32xf32>
    %cst_39 = arith.constant dense<0.000000e+00> : vector<8x96xf32>
    %39 = tpu.matmul %38, %0, %cst_39 {dimension_numbers = #tpu.dot_dimension_numbers<[1], [0], [0], [1], [0, 0, 1, 1], [], []>} : vector<8x32xf32>, vector<32x96xf32>, vector<8x96xf32> -> vector<8x96xf32>
    %40 = vector.extract_strided_slice %39 {offsets = [0, 0], sizes = [4, 96], strides = [1, 1]} : vector<8x96xf32> to vector<4x96xf32>
    %c0_40 = arith.constant 0 : index
    %c12 = arith.constant 12 : index
    %c0_41 = arith.constant 0 : index
    %41 = vector.load %arg8[%c0_40, %c12, %c0_41] : memref<2x16x96xf32, #tpu.memory_space<vmem>>, vector<1x4x96xf32>
    %42 = vector.shape_cast %41 : vector<1x4x96xf32> to vector<4x96xf32>
    %43 = vector.shape_cast %40 : vector<4x96xf32> to vector<1x4x96xf32>
    tpu.vector_store %arg8[%c0_40, %c12, %c0_41], %43 {strides = array<i32>} : memref<2x16x96xf32, #tpu.memory_space<vmem>>, vector<1x4x96xf32>,
    %44 = vector.extract_strided_slice %39 {offsets = [4, 0], sizes = [4, 96], strides = [1, 1]} : vector<8x96xf32> to vector<4x96xf32>
    %c1_42 = arith.constant 1 : index
    %c12_43 = arith.constant 12 : index
    %c0_44 = arith.constant 0 : index
    %45 = vector.load %arg8[%c1_42, %c12_43, %c0_44] : memref<2x16x96xf32, #tpu.memory_space<vmem>>, vector<1x4x96xf32>
    %46 = vector.shape_cast %45 : vector<1x4x96xf32> to vector<4x96xf32>
    %47 = vector.shape_cast %44 : vector<4x96xf32> to vector<1x4x96xf32>
    tpu.vector_store %arg8[%c1_42, %c12_43, %c0_44], %47 {strides = array<i32>} : memref<2x16x96xf32, #tpu.memory_space<vmem>>, vector<1x4x96xf32>,
    %c0_45 = arith.constant 0 : index
    %c0_46 = arith.constant 0 : index
    %c0_47 = arith.constant 0 : index
    %48 = vector.load %arg8[%c0_45, %c0_46, %c0_47] : memref<2x16x96xf32, #tpu.memory_space<vmem>>, vector<1x16x96xf32>
    %49 = vector.shape_cast %48 : vector<1x16x96xf32> to vector<16x96xf32>
    %cst_48 = arith.constant 0.000000e+00 : f32
    %50 = vector.broadcast %cst_48 : f32 to vector<16x32xf32>
    %51 = vector.extract_strided_slice %49 {offsets = [0, 0], sizes = [16, 16], strides = [1, 1]} : vector<16x96xf32> to vector<16x16xf32>
    %cst_49 = arith.constant 2.500000e-01 : f32
    %52 = vector.broadcast %cst_49 : f32 to vector<16x16xf32>
    %53 = arith.mulf %51, %52 : vector<16x16xf32>
    %54 = vector.extract_strided_slice %49 {offsets = [0, 32], sizes = [16, 16], strides = [1, 1]} : vector<16x96xf32> to vector<16x16xf32>
    %55 = vector.extract_strided_slice %49 {offsets = [0, 64], sizes = [16, 16], strides = [1, 1]} : vector<16x96xf32> to vector<16x16xf32>
    %cst_50 = arith.constant dense<0.000000e+00> : vector<16x16xf32>
    %56 = tpu.matmul %53, %54, %cst_50 {dimension_numbers = #tpu.dot_dimension_numbers<[1], [1], [0], [0], [0, 0, 1, 0], [], []>} : vector<16x16xf32>, vector<16x16xf32>, vector<16x16xf32> -> vector<16x16xf32>
    %cst_51 = arith.constant dense<0xFF800000> : vector<16xf32>
    %57 = vector.multi_reduction <maximumf>, %56, %cst_51 [1] : vector<16x16xf32> to vector<16xf32>
    %58 = vector.shape_cast %57 : vector<16xf32> to vector<16x1xf32>
    %59 = vector.broadcast %58 : vector<16x1xf32> to vector<16x16xf32>
    %60 = arith.subf %56, %59 : vector<16x16xf32>
    %61 = math.exp %60 : vector<16x16xf32>
    %cst_52 = arith.constant dense<0.000000e+00> : vector<16xf32>
    %62 = vector.multi_reduction <add>, %61, %cst_52 [1] : vector<16x16xf32> to vector<16xf32>
    %63 = vector.shape_cast %62 : vector<16xf32> to vector<16x1xf32>
    %64 = tpu.reciprocal %63 : vector<16x1xf32> -> vector<16x1xf32>
    %65 = vector.broadcast %64 : vector<16x1xf32> to vector<16x16xf32>
    %66 = arith.mulf %61, %65 : vector<16x16xf32>
    %67 = vector.extract_strided_slice %3 {offsets = [0, 0, 0], sizes = [1, 16, 16], strides = [1, 1, 1]} : vector<2x16x16xf32> to vector<1x16x16xf32>
    %68 = vector.shape_cast %67 : vector<1x16x16xf32> to vector<16x16xf32>
    %69 = arith.addf %66, %68 : vector<16x16xf32>
    %cst_53 = arith.constant dense<0.000000e+00> : vector<16x16xf32>
    %70 = tpu.matmul %69, %55, %cst_53 {dimension_numbers = #tpu.dot_dimension_numbers<[1], [0], [0], [1], [0, 0, 1, 1], [], []>} : vector<16x16xf32>, vector<16x16xf32>, vector<16x16xf32> -> vector<16x16xf32>
    %71 = vector.extract_strided_slice %1 {offsets = [0, 0], sizes = [16, 32], strides = [1, 1]} : vector<32x32xf32> to vector<16x32xf32>
    %cst_54 = arith.constant dense<0.000000e+00> : vector<16x32xf32>
    %72 = tpu.matmul %70, %71, %cst_54 {dimension_numbers = #tpu.dot_dimension_numbers<[1], [0], [0], [1], [0, 0, 1, 1], [], []>} : vector<16x16xf32>, vector<16x32xf32>, vector<16x32xf32> -> vector<16x32xf32>
    %73 = arith.addf %50, %72 : vector<16x32xf32>
    %74 = vector.extract_strided_slice %49 {offsets = [0, 16], sizes = [16, 16], strides = [1, 1]} : vector<16x96xf32> to vector<16x16xf32>
    %cst_55 = arith.constant 2.500000e-01 : f32
    %75 = vector.broadcast %cst_55 : f32 to vector<16x16xf32>
    %76 = arith.mulf %74, %75 : vector<16x16xf32>
    %77 = vector.extract_strided_slice %49 {offsets = [0, 48], sizes = [16, 16], strides = [1, 1]} : vector<16x96xf32> to vector<16x16xf32>
    %78 = vector.extract_strided_slice %49 {offsets = [0, 80], sizes = [16, 16], strides = [1, 1]} : vector<16x96xf32> to vector<16x16xf32>
    %cst_56 = arith.constant dense<0.000000e+00> : vector<16x16xf32>
    %79 = tpu.matmul %76, %77, %cst_56 {dimension_numbers = #tpu.dot_dimension_numbers<[1], [1], [0], [0], [0, 0, 1, 0], [], []>} : vector<16x16xf32>, vector<16x16xf32>, vector<16x16xf32> -> vector<16x16xf32>
    %cst_57 = arith.constant dense<0xFF800000> : vector<16xf32>
    %80 = vector.multi_reduction <maximumf>, %79, %cst_57 [1] : vector<16x16xf32> to vector<16xf32>
    %81 = vector.shape_cast %80 : vector<16xf32> to vector<16x1xf32>
    %82 = vector.broadcast %81 : vector<16x1xf32> to vector<16x16xf32>
    %83 = arith.subf %79, %82 : vector<16x16xf32>
    %84 = math.exp %83 : vector<16x16xf32>
    %cst_58 = arith.constant dense<0.000000e+00> : vector<16xf32>
    %85 = vector.multi_reduction <add>, %84, %cst_58 [1] : vector<16x16xf32> to vector<16xf32>
    %86 = vector.shape_cast %85 : vector<16xf32> to vector<16x1xf32>
    %87 = tpu.reciprocal %86 : vector<16x1xf32> -> vector<16x1xf32>
    %88 = vector.broadcast %87 : vector<16x1xf32> to vector<16x16xf32>
    %89 = arith.mulf %84, %88 : vector<16x16xf32>
    %90 = vector.extract_strided_slice %3 {offsets = [1, 0, 0], sizes = [1, 16, 16], strides = [1, 1, 1]} : vector<2x16x16xf32> to vector<1x16x16xf32>
    %91 = vector.shape_cast %90 : vector<1x16x16xf32> to vector<16x16xf32>
    %92 = arith.addf %89, %91 : vector<16x16xf32>
    %cst_59 = arith.constant dense<0.000000e+00> : vector<16x16xf32>
    %93 = tpu.matmul %92, %78, %cst_59 {dimension_numbers = #tpu.dot_dimension_numbers<[1], [0], [0], [1], [0, 0, 1, 1], [], []>} : vector<16x16xf32>, vector<16x16xf32>, vector<16x16xf32> -> vector<16x16xf32>
    %94 = vector.extract_strided_slice %1 {offsets = [16, 0], sizes = [16, 32], strides = [1, 1]} : vector<32x32xf32> to vector<16x32xf32>
    %cst_60 = arith.constant dense<0.000000e+00> : vector<16x32xf32>
    %95 = tpu.matmul %93, %94, %cst_60 {dimension_numbers = #tpu.dot_dimension_numbers<[1], [0], [0], [1], [0, 0, 1, 1], [], []>} : vector<16x16xf32>, vector<16x32xf32>, vector<16x32xf32> -> vector<16x32xf32>
    %96 = arith.addf %73, %95 : vector<16x32xf32>
    %97 = vector.broadcast %2 : vector<1x32xf32> to vector<16x32xf32>
    %98 = arith.addf %96, %97 : vector<16x32xf32>
    %99 = vector.extract_strided_slice %98 {offsets = [0, 0], sizes = [4, 32], strides = [1, 1]} : vector<16x32xf32> to vector<4x32xf32>
    %c0_61 = arith.constant 0 : index
    %c0_62 = arith.constant 0 : index
    %c0_63 = arith.constant 0 : index
    %c0_64 = arith.constant 0 : index
    %100 = vector.load %arg7[%c0_61, %c0_62, %c0_63, %c0_64] : memref<1x4x8x32xf32, #tpu.memory_space<vmem>>, vector<1x1x4x32xf32>
    %101 = vector.shape_cast %100 : vector<1x1x4x32xf32> to vector<4x32xf32>
    %102 = vector.shape_cast %99 : vector<4x32xf32> to vector<1x1x4x32xf32>
    tpu.vector_store %arg7[%c0_61, %c0_62, %c0_63, %c0_64], %102 {strides = array<i32>} : memref<1x4x8x32xf32, #tpu.memory_space<vmem>>, vector<1x1x4x32xf32>,
    %103 = vector.extract_strided_slice %98 {offsets = [4, 0], sizes = [4, 32], strides = [1, 1]} : vector<16x32xf32> to vector<4x32xf32>
    %c0_65 = arith.constant 0 : index
    %c1_66 = arith.constant 1 : index
    %c0_67 = arith.constant 0 : index
    %c0_68 = arith.constant 0 : index
    %104 = vector.load %arg7[%c0_65, %c1_66, %c0_67, %c0_68] : memref<1x4x8x32xf32, #tpu.memory_space<vmem>>, vector<1x1x4x32xf32>
    %105 = vector.shape_cast %104 : vector<1x1x4x32xf32> to vector<4x32xf32>
    %106 = vector.shape_cast %103 : vector<4x32xf32> to vector<1x1x4x32xf32>
    tpu.vector_store %arg7[%c0_65, %c1_66, %c0_67, %c0_68], %106 {strides = array<i32>} : memref<1x4x8x32xf32, #tpu.memory_space<vmem>>, vector<1x1x4x32xf32>,
    %107 = vector.extract_strided_slice %98 {offsets = [8, 0], sizes = [4, 32], strides = [1, 1]} : vector<16x32xf32> to vector<4x32xf32>
    %c0_69 = arith.constant 0 : index
    %c2_70 = arith.constant 2 : index
    %c0_71 = arith.constant 0 : index
    %c0_72 = arith.constant 0 : index
    %108 = vector.load %arg7[%c0_69, %c2_70, %c0_71, %c0_72] : memref<1x4x8x32xf32, #tpu.memory_space<vmem>>, vector<1x1x4x32xf32>
    %109 = vector.shape_cast %108 : vector<1x1x4x32xf32> to vector<4x32xf32>
    %110 = vector.shape_cast %107 : vector<4x32xf32> to vector<1x1x4x32xf32>
    tpu.vector_store %arg7[%c0_69, %c2_70, %c0_71, %c0_72], %110 {strides = array<i32>} : memref<1x4x8x32xf32, #tpu.memory_space<vmem>>, vector<1x1x4x32xf32>,
    %111 = vector.extract_strided_slice %98 {offsets = [12, 0], sizes = [4, 32], strides = [1, 1]} : vector<16x32xf32> to vector<4x32xf32>
    %c0_73 = arith.constant 0 : index
    %c3_74 = arith.constant 3 : index
    %c0_75 = arith.constant 0 : index
    %c0_76 = arith.constant 0 : index
    %112 = vector.load %arg7[%c0_73, %c3_74, %c0_75, %c0_76] : memref<1x4x8x32xf32, #tpu.memory_space<vmem>>, vector<1x1x4x32xf32>
    %113 = vector.shape_cast %112 : vector<1x1x4x32xf32> to vector<4x32xf32>
    %114 = vector.shape_cast %111 : vector<4x32xf32> to vector<1x1x4x32xf32>
    tpu.vector_store %arg7[%c0_73, %c3_74, %c0_75, %c0_76], %114 {strides = array<i32>} : memref<1x4x8x32xf32, #tpu.memory_space<vmem>>, vector<1x1x4x32xf32>,
    %c1_77 = arith.constant 1 : index
    %c0_78 = arith.constant 0 : index
    %c0_79 = arith.constant 0 : index
    %115 = vector.load %arg8[%c1_77, %c0_78, %c0_79] : memref<2x16x96xf32, #tpu.memory_space<vmem>>, vector<1x16x96xf32>
    %116 = vector.shape_cast %115 : vector<1x16x96xf32> to vector<16x96xf32>
    %cst_80 = arith.constant 0.000000e+00 : f32
    %117 = vector.broadcast %cst_80 : f32 to vector<16x32xf32>
    %118 = vector.extract_strided_slice %116 {offsets = [0, 0], sizes = [16, 16], strides = [1, 1]} : vector<16x96xf32> to vector<16x16xf32>
    %cst_81 = arith.constant 2.500000e-01 : f32
    %119 = vector.broadcast %cst_81 : f32 to vector<16x16xf32>
    %120 = arith.mulf %118, %119 : vector<16x16xf32>
    %121 = vector.extract_strided_slice %116 {offsets = [0, 32], sizes = [16, 16], strides = [1, 1]} : vector<16x96xf32> to vector<16x16xf32>
    %122 = vector.extract_strided_slice %116 {offsets = [0, 64], sizes = [16, 16], strides = [1, 1]} : vector<16x96xf32> to vector<16x16xf32>
    %cst_82 = arith.constant dense<0.000000e+00> : vector<16x16xf32>
    %123 = tpu.matmul %120, %121, %cst_82 {dimension_numbers = #tpu.dot_dimension_numbers<[1], [1], [0], [0], [0, 0, 1, 0], [], []>} : vector<16x16xf32>, vector<16x16xf32>, vector<16x16xf32> -> vector<16x16xf32>
    %cst_83 = arith.constant dense<0xFF800000> : vector<16xf32>
    %124 = vector.multi_reduction <maximumf>, %123, %cst_83 [1] : vector<16x16xf32> to vector<16xf32>
    %125 = vector.shape_cast %124 : vector<16xf32> to vector<16x1xf32>
    %126 = vector.broadcast %125 : vector<16x1xf32> to vector<16x16xf32>
    %127 = arith.subf %123, %126 : vector<16x16xf32>
    %128 = math.exp %127 : vector<16x16xf32>
    %cst_84 = arith.constant dense<0.000000e+00> : vector<16xf32>
    %129 = vector.multi_reduction <add>, %128, %cst_84 [1] : vector<16x16xf32> to vector<16xf32>
    %130 = vector.shape_cast %129 : vector<16xf32> to vector<16x1xf32>
    %131 = tpu.reciprocal %130 : vector<16x1xf32> -> vector<16x1xf32>
    %132 = vector.broadcast %131 : vector<16x1xf32> to vector<16x16xf32>
    %133 = arith.mulf %128, %132 : vector<16x16xf32>
    %134 = vector.extract_strided_slice %3 {offsets = [0, 0, 0], sizes = [1, 16, 16], strides = [1, 1, 1]} : vector<2x16x16xf32> to vector<1x16x16xf32>
    %135 = vector.shape_cast %134 : vector<1x16x16xf32> to vector<16x16xf32>
    %136 = arith.addf %133, %135 : vector<16x16xf32>
    %cst_85 = arith.constant dense<0.000000e+00> : vector<16x16xf32>
    %137 = tpu.matmul %136, %122, %cst_85 {dimension_numbers = #tpu.dot_dimension_numbers<[1], [0], [0], [1], [0, 0, 1, 1], [], []>} : vector<16x16xf32>, vector<16x16xf32>, vector<16x16xf32> -> vector<16x16xf32>
    %138 = vector.extract_strided_slice %1 {offsets = [0, 0], sizes = [16, 32], strides = [1, 1]} : vector<32x32xf32> to vector<16x32xf32>
    %cst_86 = arith.constant dense<0.000000e+00> : vector<16x32xf32>
    %139 = tpu.matmul %137, %138, %cst_86 {dimension_numbers = #tpu.dot_dimension_numbers<[1], [0], [0], [1], [0, 0, 1, 1], [], []>} : vector<16x16xf32>, vector<16x32xf32>, vector<16x32xf32> -> vector<16x32xf32>
    %140 = arith.addf %117, %139 : vector<16x32xf32>
    %141 = vector.extract_strided_slice %116 {offsets = [0, 16], sizes = [16, 16], strides = [1, 1]} : vector<16x96xf32> to vector<16x16xf32>
    %cst_87 = arith.constant 2.500000e-01 : f32
    %142 = vector.broadcast %cst_87 : f32 to vector<16x16xf32>
    %143 = arith.mulf %141, %142 : vector<16x16xf32>
    %144 = vector.extract_strided_slice %116 {offsets = [0, 48], sizes = [16, 16], strides = [1, 1]} : vector<16x96xf32> to vector<16x16xf32>
    %145 = vector.extract_strided_slice %116 {offsets = [0, 80], sizes = [16, 16], strides = [1, 1]} : vector<16x96xf32> to vector<16x16xf32>
    %cst_88 = arith.constant dense<0.000000e+00> : vector<16x16xf32>
    %146 = tpu.matmul %143, %144, %cst_88 {dimension_numbers = #tpu.dot_dimension_numbers<[1], [1], [0], [0], [0, 0, 1, 0], [], []>} : vector<16x16xf32>, vector<16x16xf32>, vector<16x16xf32> -> vector<16x16xf32>
    %cst_89 = arith.constant dense<0xFF800000> : vector<16xf32>
    %147 = vector.multi_reduction <maximumf>, %146, %cst_89 [1] : vector<16x16xf32> to vector<16xf32>
    %148 = vector.shape_cast %147 : vector<16xf32> to vector<16x1xf32>
    %149 = vector.broadcast %148 : vector<16x1xf32> to vector<16x16xf32>
    %150 = arith.subf %146, %149 : vector<16x16xf32>
    %151 = math.exp %150 : vector<16x16xf32>
    %cst_90 = arith.constant dense<0.000000e+00> : vector<16xf32>
    %152 = vector.multi_reduction <add>, %151, %cst_90 [1] : vector<16x16xf32> to vector<16xf32>
    %153 = vector.shape_cast %152 : vector<16xf32> to vector<16x1xf32>
    %154 = tpu.reciprocal %153 : vector<16x1xf32> -> vector<16x1xf32>
    %155 = vector.broadcast %154 : vector<16x1xf32> to vector<16x16xf32>
    %156 = arith.mulf %151, %155 : vector<16x16xf32>
    %157 = vector.extract_strided_slice %3 {offsets = [1, 0, 0], sizes = [1, 16, 16], strides = [1, 1, 1]} : vector<2x16x16xf32> to vector<1x16x16xf32>
    %158 = vector.shape_cast %157 : vector<1x16x16xf32> to vector<16x16xf32>
    %159 = arith.addf %156, %158 : vector<16x16xf32>
    %cst_91 = arith.constant dense<0.000000e+00> : vector<16x16xf32>
    %160 = tpu.matmul %159, %145, %cst_91 {dimension_numbers = #tpu.dot_dimension_numbers<[1], [0], [0], [1], [0, 0, 1, 1], [], []>} : vector<16x16xf32>, vector<16x16xf32>, vector<16x16xf32> -> vector<16x16xf32>
    %161 = vector.extract_strided_slice %1 {offsets = [16, 0], sizes = [16, 32], strides = [1, 1]} : vector<32x32xf32> to vector<16x32xf32>
    %cst_92 = arith.constant dense<0.000000e+00> : vector<16x32xf32>
    %162 = tpu.matmul %160, %161, %cst_92 {dimension_numbers = #tpu.dot_dimension_numbers<[1], [0], [0], [1], [0, 0, 1, 1], [], []>} : vector<16x16xf32>, vector<16x32xf32>, vector<16x32xf32> -> vector<16x32xf32>
    %163 = arith.addf %140, %162 : vector<16x32xf32>
    %164 = vector.broadcast %2 : vector<1x32xf32> to vector<16x32xf32>
    %165 = arith.addf %163, %164 : vector<16x32xf32>
    %166 = vector.extract_strided_slice %165 {offsets = [0, 0], sizes = [4, 32], strides = [1, 1]} : vector<16x32xf32> to vector<4x32xf32>
    %c0_93 = arith.constant 0 : index
    %c0_94 = arith.constant 0 : index
    %c4_95 = arith.constant 4 : index
    %c0_96 = arith.constant 0 : index
    %167 = vector.load %arg7[%c0_93, %c0_94, %c4_95, %c0_96] : memref<1x4x8x32xf32, #tpu.memory_space<vmem>>, vector<1x1x4x32xf32>
    %168 = vector.shape_cast %167 : vector<1x1x4x32xf32> to vector<4x32xf32>
    %169 = vector.shape_cast %166 : vector<4x32xf32> to vector<1x1x4x32xf32>
    tpu.vector_store %arg7[%c0_93, %c0_94, %c4_95, %c0_96], %169 {strides = array<i32>} : memref<1x4x8x32xf32, #tpu.memory_space<vmem>>, vector<1x1x4x32xf32>,
    %170 = vector.extract_strided_slice %165 {offsets = [4, 0], sizes = [4, 32], strides = [1, 1]} : vector<16x32xf32> to vector<4x32xf32>
    %c0_97 = arith.constant 0 : index
    %c1_98 = arith.constant 1 : index
    %c4_99 = arith.constant 4 : index
    %c0_100 = arith.constant 0 : index
    %171 = vector.load %arg7[%c0_97, %c1_98, %c4_99, %c0_100] : memref<1x4x8x32xf32, #tpu.memory_space<vmem>>, vector<1x1x4x32xf32>
    %172 = vector.shape_cast %171 : vector<1x1x4x32xf32> to vector<4x32xf32>
    %173 = vector.shape_cast %170 : vector<4x32xf32> to vector<1x1x4x32xf32>
    tpu.vector_store %arg7[%c0_97, %c1_98, %c4_99, %c0_100], %173 {strides = array<i32>} : memref<1x4x8x32xf32, #tpu.memory_space<vmem>>, vector<1x1x4x32xf32>,
    %174 = vector.extract_strided_slice %165 {offsets = [8, 0], sizes = [4, 32], strides = [1, 1]} : vector<16x32xf32> to vector<4x32xf32>
    %c0_101 = arith.constant 0 : index
    %c2_102 = arith.constant 2 : index
    %c4_103 = arith.constant 4 : index
    %c0_104 = arith.constant 0 : index
    %175 = vector.load %arg7[%c0_101, %c2_102, %c4_103, %c0_104] : memref<1x4x8x32xf32, #tpu.memory_space<vmem>>, vector<1x1x4x32xf32>
    %176 = vector.shape_cast %175 : vector<1x1x4x32xf32> to vector<4x32xf32>
    %177 = vector.shape_cast %174 : vector<4x32xf32> to vector<1x1x4x32xf32>
    tpu.vector_store %arg7[%c0_101, %c2_102, %c4_103, %c0_104], %177 {strides = array<i32>} : memref<1x4x8x32xf32, #tpu.memory_space<vmem>>, vector<1x1x4x32xf32>,
    %178 = vector.extract_strided_slice %165 {offsets = [12, 0], sizes = [4, 32], strides = [1, 1]} : vector<16x32xf32> to vector<4x32xf32>
    %c0_105 = arith.constant 0 : index
    %c3_106 = arith.constant 3 : index
    %c4_107 = arith.constant 4 : index
    %c0_108 = arith.constant 0 : index
    %179 = vector.load %arg7[%c0_105, %c3_106, %c4_107, %c0_108] : memref<1x4x8x32xf32, #tpu.memory_space<vmem>>, vector<1x1x4x32xf32>
    %180 = vector.shape_cast %179 : vector<1x1x4x32xf32> to vector<4x32xf32>
    %181 = vector.shape_cast %178 : vector<4x32xf32> to vector<1x1x4x32xf32>
    tpu.vector_store %arg7[%c0_105, %c3_106, %c4_107, %c0_108], %181 {strides = array<i32>} : memref<1x4x8x32xf32, #tpu.memory_space<vmem>>, vector<1x1x4x32xf32>,
    return
  }
  func.func @transform_0(%arg0: i32, %arg1: i32) -> (i32, i32, i32, i32) {
    %c0_i32 = arith.constant 0 : i32
    %c0_i32_0 = arith.constant 0 : i32
    %c0_i32_1 = arith.constant 0 : i32
    return %arg0, %arg1, %c0_i32, %c0_i32_0 : i32, i32, i32, i32
  }
  func.func @transform_1(%arg0: i32, %arg1: i32) -> (i32, i32) {
    %c0_i32 = arith.constant 0 : i32
    %c0_i32_0 = arith.constant 0 : i32
    %c0_i32_1 = arith.constant 0 : i32
    return %c0_i32, %c0_i32_0 : i32, i32
  }
  func.func @transform_2(%arg0: i32, %arg1: i32) -> (i32, i32, i32) {
    %c0_i32 = arith.constant 0 : i32
    %c0_i32_0 = arith.constant 0 : i32
    %c0_i32_1 = arith.constant 0 : i32
    %c0_i32_2 = arith.constant 0 : i32
    return %c0_i32, %c0_i32_0, %c0_i32_1 : i32, i32, i32
  }
  func.func @transform_3(%arg0: i32, %arg1: i32) -> (i32, i32) {
    %c0_i32 = arith.constant 0 : i32
    %c0_i32_0 = arith.constant 0 : i32
    %c0_i32_1 = arith.constant 0 : i32
    return %c0_i32, %c0_i32_0 : i32, i32
  }
  func.func @transform_4(%arg0: i32, %arg1: i32) -> (i32, i32) {
    %c0_i32 = arith.constant 0 : i32
    %c0_i32_0 = arith.constant 0 : i32
    %c0_i32_1 = arith.constant 0 : i32
    return %c0_i32, %c0_i32_0 : i32, i32
  }
  func.func @transform_5(%arg0: i32, %arg1: i32) -> (i32, i32, i32, i32) {
    %c0_i32 = arith.constant 0 : i32
    %c0_i32_0 = arith.constant 0 : i32
    %c0_i32_1 = arith.constant 0 : i32
    return %arg0, %arg1, %c0_i32, %c0_i32_0 : i32, i32, i32, i32
  }
}

</mosaic_0001>

<llo_original>
// kernel: tpu_custom_call.1
$region0: #{tpu_custom_call.1}
  #allocation0 [shape = 'u32[]', space=smem, size = 0x4, offset = 0x4, fixed_abs, tag = 'smem constant byte address 0x4 - core index']
  #allocation1 [shape = 'u32[72,128]{1,0:T(1,128)}', space=vmem, size = 0x9000, scoped, tag = 'internal scratch']
  #allocation2 [shape = 'f32[2,16,96]{2,1,0:T(8,128)}', space=vmem, size = 0x4000, scoped, tag = 'scratch operand']
  %s0 = inlined_call_operand.hbm [shape: f32[2,8,8,32], index: 0, kind: input, shape index: {}]
  %s1 = inlined_call_operand.hbm [shape: f32[32,96], index: 1, kind: input, shape index: {}]
  %s2 = inlined_call_operand.hbm [shape: f32[2,16,16], index: 2, kind: input, shape index: {}]
  %s3 = inlined_call_operand.hbm [shape: f32[32,32], index: 3, kind: input, shape index: {}]
  %s4 = inlined_call_operand.vmem [shape: f32[1,32], index: 4, kind: input, shape index: {}]
  %s5 = inlined_call_operand.hbm [shape: f32[2,8,8,32], index: 5, kind: output, shape index: {}]
  %s6 = sld [smem:[#allocation0]]
  $region69: #{tpu_custom_call.1} parent=0
    _
  %s8 = ssub.s32 1, %s6
  %s9 = scalar_select 0, %s8, %s6
  $region1: #{tpu_custom_call.1} parent=0
    #allocation3 [shape = 'u8[32768]{0}', space=vmem, size = 0x8000, scoped, tag = 'input window, operand 0']
    #allocation4 [shape = 's32[2]{0}', space=sflag, size = 0x8, scoped, tag = 'scoped memory for tpu_custom_call.1']
    #allocation5 [shape = 's32[2]{0}', space=sflag, size = 0x8, scoped, tag = 'scoped memory for tpu_custom_call.1']
    #allocation6 [shape = 'u8[16384]{0}', space=vmem, size = 0x4000, scoped, tag = 'input window, operand 1, single buffered']
    #allocation7 [shape = 's32[1]{0}', space=sflag, size = 0x4, scoped, tag = 'scoped memory for tpu_custom_call.1']
    #allocation8 [shape = 'u8[16384]{0}', space=vmem, size = 0x4000, scoped, tag = 'input window, operand 2, single buffered']
    #allocation9 [shape = 'u8[16384]{0}', space=vmem, size = 0x4000, scoped, tag = 'input window, operand 3, single buffered']
    #allocation10 [shape = 's32[1]{0}', space=sflag, size = 0x4, scoped, tag = 'scoped memory for tpu_custom_call.1']
    #allocation11 [shape = 'u8[32768]{0}', space=vmem, size = 0x8000, scoped, tag = 'output window, operand 0']
    %10 = vsyncpa [#allocation4], 0
    %s11 = scalar_lea.sflag [#allocation4], 1
    %12 = vsyncpa %s11, 0
    %13 = vsyncpa [#allocation7], 0
    %14 = vsyncpa [#allocation10], 0
    %15 = vsyncpa [#allocation5], 0
    %s16 = scalar_lea.sflag [#allocation5], 1
    %17 = vsyncpa %s16, 0
    loop: start=0, step=1, limit=6
    $region2: #{tpu_custom_call.1} parent=1 // loop_pre_header
      _
    $region3: #{tpu_custom_call.1} parent=1 // loop_header
      %s19 = sphi 0, %s23
      %p20 = scmp.ge.s32.totalorder %s19, 6
      %s26 = sphi 0, %s38
      %s27 = sphi 0, %s34
      %s28 = sphi 0, %s26
      %s29 = sphi 0, %s27
      %s30 = sphi 0, %s28
      %s31 = sphi 0, %s29
      %s43 = sphi 0, %s45
      %s46 = sphi 0, %s43
      %s47 = sphi 0, %s46
      %s63 = sphi 0, %s47
      %s67 = sphi 0, %s67
      %s69 = sphi 0, %s67
      %s70 = sphi 0, %s69
      %s84 = sphi 0, %s70
      %s88 = sphi 0, %s88
      %s90 = sphi 0, %s88
      %s91 = sphi 0, %s90
      %s105 = sphi 0, %s91
      %s109 = sphi 0, %s109
      %s111 = sphi 0, %s109
      %s112 = sphi 0, %s111
      %s126 = sphi 0, %s112
      %s130 = sphi 0, %s130
      %s132 = sphi 0, %s130
      %s133 = sphi 0, %s132
      %s147 = sphi 0, %s133
      %s155 = sphi 0, %s157
      %s158 = sphi 0, %s155
      %s159 = sphi 0, %s158
      %s175 = sphi 0, %s159
    $region4: #{tpu_custom_call.1} parent=1 // loop_header_branch
      %22 = sbr.rel (%p20) target = $region8
    $region5: #{tpu_custom_call.1} parent=1 // loop_body
      %s24 = ssub.s32 %s19, 1
      %s25 = ssub.s32 %s19, 2
      %s32 = sadd.s32 1, %s27
      %p33 = scmp.ge.s32.totalorder %s32, 2
      %s34 = scalar_select %p33, 0, %s32
      %s35 = sadd.s32 1, %s26
      %s36 = scalar_select %p33, %s35, %s26
      %p37 = scmp.ge.s32.totalorder %s36, 2
      %s38 = scalar_select %p37, 0, %s36
      %s39 = ssub.s32 %s26, %s38
      %s40 = ssub.s32 %s27, %s34
      %s41 = sor.u32 %s39, %s40
      %p42 = scmp.eq.s32.totalorder %s41, 0
      %s44 = sadd.s32 %s43, 1
      %s45 = scalar_select %p42, %s43, %s44
      %p48 = pneg %p42
      %p49 = scmp.eq.s32.totalorder %s19, 3
      %p50 = por %p48, %p49
      %p51 = scmp.ne.s32.totalorder %s43, %s46
      %p52 = scmp.eq.s32.totalorder %s19, 0
      %p53 = por %p51, %p52
      %p54 = scmp.ne.s32.totalorder %s43, %s46
      %p55 = scmp.eq.s32.totalorder %s24, 3
      %p56 = por %p54, %p55
      %p57 = scmp.ne.s32.totalorder %s46, %s47
      %p58 = scmp.eq.s32.totalorder %s24, 0
      %p59 = por %p57, %p58
      %p60 = scmp.ne.s32.totalorder %s46, %s47
      %p61 = scmp.eq.s32.totalorder %s25, 3
      %p62 = por %p60, %p61
      %p64 = scmp.ne.s32.totalorder %s47, %s63
      %p65 = scmp.eq.s32.totalorder %s25, 0
      %p66 = por %p64, %p65
      %s68 = sadd.s32 %s67, 1
      %p71 = scmp.eq.s32.totalorder %s19, 3
      %p72 = scmp.ne.s32.totalorder %s67, %s69
      %p73 = scmp.eq.s32.totalorder %s19, 0
      %p74 = por %p72, %p73
      %p75 = scmp.ne.s32.totalorder %s67, %s69
      %p76 = scmp.eq.s32.totalorder %s24, 3
      %p77 = por %p75, %p76
      %p78 = scmp.ne.s32.totalorder %s69, %s70
      %p79 = scmp.eq.s32.totalorder %s24, 0
      %p80 = por %p78, %p79
      %p81 = scmp.ne.s32.totalorder %s69, %s70
      %p82 = scmp.eq.s32.totalorder %s25, 3
      %p83 = por %p81, %p82
      %p85 = scmp.ne.s32.totalorder %s70, %s84
      %p86 = scmp.eq.s32.totalorder %s25, 0
      %p87 = por %p85, %p86
      %s89 = sadd.s32 %s88, 1
      %p92 = scmp.eq.s32.totalorder %s19, 3
      %p93 = scmp.ne.s32.totalorder %s88, %s90
      %p94 = scmp.eq.s32.totalorder %s19, 0
      %p95 = por %p93, %p94
      %p96 = scmp.ne.s32.totalorder %s88, %s90
      %p97 = scmp.eq.s32.totalorder %s24, 3
      %p98 = por %p96, %p97
      %p99 = scmp.ne.s32.totalorder %s90, %s91
      %p100 = scmp.eq.s32.totalorder %s24, 0
      %p101 = por %p99, %p100
      %p102 = scmp.ne.s32.totalorder %s90, %s91
      %p103 = scmp.eq.s32.totalorder %s25, 3
      %p104 = por %p102, %p103
      %p106 = scmp.ne.s32.totalorder %s91, %s105
      %p107 = scmp.eq.s32.totalorder %s25, 0
      %p108 = por %p106, %p107
      %s110 = sadd.s32 %s109, 1
      %p113 = scmp.eq.s32.totalorder %s19, 3
      %p114 = scmp.ne.s32.totalorder %s109, %s111
      %p115 = scmp.eq.s32.totalorder %s19, 0
      %p116 = por %p114, %p115
      %p117 = scmp.ne.s32.totalorder %s109, %s111
      %p118 = scmp.eq.s32.totalorder %s24, 3
      %p119 = por %p117, %p118
      %p120 = scmp.ne.s32.totalorder %s111, %s112
      %p121 = scmp.eq.s32.totalorder %s24, 0
      %p122 = por %p120, %p121
      %p123 = scmp.ne.s32.totalorder %s111, %s112
      %p124 = scmp.eq.s32.totalorder %s25, 3
      %p125 = por %p123, %p124
      %p127 = scmp.ne.s32.totalorder %s112, %s126
      %p128 = scmp.eq.s32.totalorder %s25, 0
      %p129 = por %p127, %p128
      %s131 = sadd.s32 %s130, 1
      %p134 = scmp.eq.s32.totalorder %s19, 3
      %p135 = scmp.ne.s32.totalorder %s130, %s132
      %p136 = scmp.eq.s32.totalorder %s19, 0
      %p137 = por %p135, %p136
      %p138 = scmp.ne.s32.totalorder %s130, %s132
      %p139 = scmp.eq.s32.totalorder %s24, 3
      %p140 = por %p138, %p139
      %p141 = scmp.ne.s32.totalorder %s132, %s133
      %p142 = scmp.eq.s32.totalorder %s24, 0
      %p143 = por %p141, %p142
      %p144 = scmp.ne.s32.totalorder %s132, %s133
      %p145 = scmp.eq.s32.totalorder %s25, 3
      %p146 = por %p144, %p145
      %p148 = scmp.ne.s32.totalorder %s133, %s147
      %p149 = scmp.eq.s32.totalorder %s25, 0
      %p150 = por %p148, %p149
      %s151 = ssub.s32 %s26, %s38
      %s152 = ssub.s32 %s27, %s34
      %s153 = sor.u32 %s151, %s152
      %p154 = scmp.eq.s32.totalorder %s153, 0
      %s156 = sadd.s32 %s155, 1
      %s157 = scalar_select %p154, %s155, %s156
      %p160 = pneg %p154
      %p161 = scmp.eq.s32.totalorder %s19, 3
      %p162 = por %p160, %p161
      %p163 = scmp.ne.s32.totalorder %s155, %s158
      %p164 = scmp.eq.s32.totalorder %s19, 0
      %p165 = por %p163, %p164
      %p166 = scmp.ne.s32.totalorder %s155, %s158
      %p167 = scmp.eq.s32.totalorder %s24, 3
      %p168 = por %p166, %p167
      %p169 = scmp.ne.s32.totalorder %s158, %s159
      %p170 = scmp.eq.s32.totalorder %s24, 0
      %p171 = por %p169, %p170
      %p172 = scmp.ne.s32.totalorder %s158, %s159
      %p173 = scmp.eq.s32.totalorder %s25, 3
      %p174 = por %p172, %p173
      %p176 = scmp.ne.s32.totalorder %s159, %s175
      %p177 = scmp.eq.s32.totalorder %s25, 0
      %p178 = por %p176, %p177
      %p179 = scmp.le.s32.totalorder 1, %s19
      %p180 = scmp.lt.s32.totalorder %s19, 5
      %p181 = pnand %p179, %p180
      %p182 = pneg %p181
      // Predicated region
      $region9: #{tpu_custom_call.1} parent=5 // pred_check
        _
      $region10: #{tpu_custom_call.1} parent=5 // pred_check_branch
        %184 = sbr.rel (%p181) target = $region12
      $region11: #{tpu_custom_call.1} parent=5 // pred_region
        %s185 = ssub.s32 %s19, 1
        // Predicated region
        $region13: #{tpu_custom_call.1} parent=11 // pred_check
          %p186 = pneg %p80
        $region14: #{tpu_custom_call.1} parent=11 // pred_check_branch
          %188 = sbr.rel (%p186) target = $region16
        $region15: #{tpu_custom_call.1} parent=11 // pred_region
          %190 = vsyncadd [#allocation7], 0
          %s191 = sshll.u32 %s1, 4
          %s192 = int_to_ptr.hbm [resolvable:$true] %s191
          %s193 = sshll.u32 [#allocation6], 4
          %s194 = int_to_ptr.vmem [resolvable:$true] %s193
          %199 = dma.hbm_to_vmem [thread:$0]  %s192, 512, %s194, [#allocation7], 128, 128, 8
        $region16: #{tpu_custom_call.1} parent=11 // pred_fallthru
          _
        // Predicated region
        $region17: #{tpu_custom_call.1} parent=11 // pred_check
          %p200 = pneg %p101
        $region18: #{tpu_custom_call.1} parent=11 // pred_check_branch
          %202 = sbr.rel (%p200) target = $region20
        $region19: #{tpu_custom_call.1} parent=11 // pred_region
          %204 = vsyncadd [#allocation7], 0
          %s205 = sshll.u32 %s2, 4
          %s206 = int_to_ptr.hbm [resolvable:$true] %s205
          %s207 = sshll.u32 [#allocation8], 4
          %s208 = int_to_ptr.vmem [resolvable:$true] %s207
          %213 = dma.hbm_to_vmem [thread:$0]  %s206, 512, %s208, [#allocation7], 128, 128, 8
        $region20: #{tpu_custom_call.1} parent=11 // pred_fallthru
          _
        // Predicated region
        $region21: #{tpu_custom_call.1} parent=11 // pred_check
          %p214 = pneg %p122
        $region22: #{tpu_custom_call.1} parent=11 // pred_check_branch
          %216 = sbr.rel (%p214) target = $region24
        $region23: #{tpu_custom_call.1} parent=11 // pred_region
          %218 = vsyncadd [#allocation10], 0
          %s219 = sshll.u32 %s3, 4
          %s220 = int_to_ptr.hbm [resolvable:$true] %s219
          %s221 = sshll.u32 [#allocation9], 4
          %s222 = int_to_ptr.vmem [resolvable:$true] %s221
          %227 = dma.hbm_to_vmem [thread:$0]  %s220, 512, %s222, [#allocation10], 128, 128, 8
        $region24: #{tpu_custom_call.1} parent=11 // pred_fallthru
          _
        // Predicated region
        $region25: #{tpu_custom_call.1} parent=11 // pred_check
          %p228 = pneg %p143
        $region26: #{tpu_custom_call.1} parent=11 // pred_check_branch
          %230 = sbr.rel (%p228) target = $region28
        $region27: #{tpu_custom_call.1} parent=11 // pred_region
          _
        $region28: #{tpu_custom_call.1} parent=11 // pred_fallthru
          _
      $region12: #{tpu_custom_call.1} parent=5 // pred_fallthru
        _
      %p231 = scmp.lt.s32.totalorder %s19, 4
      // Predicated region
      $region29: #{tpu_custom_call.1} parent=5 // pred_check
        %p232 = pneg %p231
      $region30: #{tpu_custom_call.1} parent=5 // pred_check_branch
        %234 = sbr.rel (%p232) target = $region32
      $region31: #{tpu_custom_call.1} parent=5 // pred_region
        // Predicated region
        $region33: #{tpu_custom_call.1} parent=31 // pred_check
          %p235 = pneg %p53
        $region34: #{tpu_custom_call.1} parent=31 // pred_check_branch
          %237 = sbr.rel (%p235) target = $region36
        $region35: #{tpu_custom_call.1} parent=31 // pred_region
          %s238 = sand.u32 %s43, 1
          %s239 = scalar_lea.sflag [#allocation4], %s238
          %s240 = sand.u32 %s43, 1
          %s241 = smul.addr %s240, 32
          %s242 = scalar_lea.vmem [#allocation3], %s241
          %s243 = smul.u32 4, %s27
          %245 = vsyncadd %s239, 0
          %s246 = smul.addr %s26, 8
          %s247 = sadd.s32 %s243, %s246
          %s248 = smul.addr %s247, 8
          %s249 = scalar_lea.hbm %s0, %s248
          %s250 = sshll.u32 %s249, 4
          %s251 = int_to_ptr.hbm [resolvable:$true] %s250
          %s252 = sshll.u32 %s242, 4
          %s253 = int_to_ptr.vmem [resolvable:$true] %s252
          %258 = dma.hbm_to_vmem [thread:$0]  %s251, 512, %s253, %s239, 128, 128, 8
        $region36: #{tpu_custom_call.1} parent=31 // pred_fallthru
          _
      $region32: #{tpu_custom_call.1} parent=5 // pred_fallthru
        _
      %p259 = scmp.le.s32.totalorder 1, %s19
      %p260 = scmp.lt.s32.totalorder %s19, 5
      %p261 = pnand %p259, %p260
      %p262 = pneg %p261
      // Predicated region
      $region37: #{tpu_custom_call.1} parent=5 // pred_check
        _
      $region38: #{tpu_custom_call.1} parent=5 // pred_check_branch
        %264 = sbr.rel (%p261) target = $region40
      $region39: #{tpu_custom_call.1} parent=5 // pred_region
        %s265 = ssub.s32 %s19, 1
        %s266 = sand.u32 %s46, 1
        %s267 = scalar_lea.sflag [#allocation4], %s266
        %s268 = sand.u32 %s46, 1
        %s269 = smul.addr %s268, 32
        %s270 = scalar_lea.vmem [#allocation3], %s269
        // Predicated region
        $region41: #{tpu_custom_call.1} parent=39 // pred_check
          %p271 = pneg %p59
        $region42: #{tpu_custom_call.1} parent=39 // pred_check_branch
          %273 = sbr.rel (%p271) target = $region44
        $region43: #{tpu_custom_call.1} parent=39 // pred_region
          %275 = dma.done %s267, 512
        $region44: #{tpu_custom_call.1} parent=39 // pred_fallthru
          _
        // Predicated region
        $region45: #{tpu_custom_call.1} parent=39 // pred_check
          %p276 = pneg %p80
        $region46: #{tpu_custom_call.1} parent=39 // pred_check_branch
          %278 = sbr.rel (%p276) target = $region48
        $region47: #{tpu_custom_call.1} parent=39 // pred_region
          %280 = dma.done [#allocation7], 512
        $region48: #{tpu_custom_call.1} parent=39 // pred_fallthru
          _
        // Predicated region
        $region49: #{tpu_custom_call.1} parent=39 // pred_check
          %p281 = pneg %p101
        $region50: #{tpu_custom_call.1} parent=39 // pred_check_branch
          %283 = sbr.rel (%p281) target = $region52
        $region51: #{tpu_custom_call.1} parent=39 // pred_region
          %285 = dma.done [#allocation7], 512
        $region52: #{tpu_custom_call.1} parent=39 // pred_fallthru
          _
        // Predicated region
        $region53: #{tpu_custom_call.1} parent=39 // pred_check
          %p286 = pneg %p122
        $region54: #{tpu_custom_call.1} parent=39 // pred_check_branch
          %288 = sbr.rel (%p286) target = $region56
        $region55: #{tpu_custom_call.1} parent=39 // pred_region
          %290 = dma.done [#allocation10], 512
        $region56: #{tpu_custom_call.1} parent=39 // pred_fallthru
          _
        %s291 = sand.u32 %s46, 1
        %s292 = scalar_lea.sflag [#allocation4], %s291
        %s293 = sand.u32 %s46, 1
        %s294 = smul.addr %s293, 32
        %s295 = scalar_lea.vmem [#allocation3], %s294
        %p296 = pneg %p59
        %p297 = pneg %p56
        %p298 = pneg %p80
        %p299 = pneg %p77
        %p300 = pneg %p101
        %p301 = pneg %p98
        %p302 = pneg %p122
        %p303 = pneg %p119
        %p304 = pneg %p143
        %p305 = pneg %p140
        %p306 = pneg %p171
        %p307 = pneg %p168
        %s308 = sand.u32 %s158, 1
        %s309 = scalar_lea.sflag [#allocation5], %s308
        %s310 = sand.u32 %s158, 1
        %s311 = smul.addr %s310, 32
        %s312 = scalar_lea.vmem [#allocation11], %s311
        %s313 = smul.u32 4, %s29
        %s314 = smul.u32 4, %s29
        %v315 = vld [vmem:[#allocation6] sm:$0xff]
        %v316 = vld [vmem:[#allocation6 + $0x8] sm:$0xff]
        %v317 = vld [vmem:[#allocation6 + $0x10] sm:$0xff]
        %v318 = vld [vmem:[#allocation6 + $0x18] sm:$0xff]
        %v319 = vld [vmem:[#allocation9] sm:$0xff]
        %v320 = vld [vmem:[#allocation9 + $0x8] sm:$0xff]
        %v321 = vld [vmem:[#allocation9 + $0x10] sm:$0xff]
        %v322 = vld [vmem:[#allocation9 + $0x18] sm:$0xff]
        %v323 = vld [vmem:[%s4] sm:$0x1]
        %v324 = vld [vmem:[#allocation8] sm:$0xff]
        %v325 = vld [vmem:[#allocation8 + $0x8] sm:$0xff]
        %v326 = vld [vmem:[#allocation8 + $0x10] sm:$0xff]
        %v327 = vld [vmem:[#allocation8 + $0x18] sm:$0xff]
        %v328 = vld [vmem:[%s270] sm:$0xff]
        %vm329 = vcmask 261120
        %v331 = vsel %vm329, %v328, 0
        %333 = vmatpush.msra.mxu0 0.0
        %334 = vmatpush.msra.mxu0 0.0
        %335 = vmatpush.msra.mxu0 0.0
        %336 = vmatpush.msra.mxu0 0.0
        %337 = vmatpush.msra.mxu0 0.0
        %338 = vmatpush.msra.mxu0 0.0
        %339 = vmatpush.msra.mxu0 0.0
        %340 = vmatpush.msra.mxu0 0.0
        %341 = vmatpush.msra.mxu0 0.0
        %342 = vmatpush.msra.mxu0 0.0
        %343 = vmatpush.msra.mxu0 0.0
        %344 = vmatpush.msra.mxu0 0.0
        %345 = vmatpush.msra.mxu0 %v318
        %346 = vmatpush.msra.mxu0 %v317
        %347 = vmatpush.msra.mxu0 %v316
        %348 = vmatpush.msra.mxu0 %v315
        %349 = vmatmul.f32.gmra.mxu0 %v331
        %v350 = vpop.f32.mrf.mxu0
        %v351 = vadd.f32 0.0, %v350
        %352 = vdwg.mxu0
        %vm353 = vcmask 781312
        %354 = vst.msk [vmem:[#allocation2] sm:$0xf] %vm353, %v351
        %s355 = scalar_lea.vmem [#allocation2], 16
        %vm356 = vcmask 785412
        %357 = vst.msk [vmem:[%s355 - $0x4] sm:$0xf0] %vm356, %v351
        %s358 = scalar_lea.vmem %s270, 8 [#allocation3]
        %v359 = vld [vmem:[%s358] sm:$0xff]
        %v361 = vsel %vm329, %v359, 0
        %363 = vmatpush.msra.mxu0 0.0
        %364 = vmatpush.msra.mxu0 0.0
        %365 = vmatpush.msra.mxu0 0.0
        %366 = vmatpush.msra.mxu0 0.0
        %367 = vmatpush.msra.mxu0 0.0
        %368 = vmatpush.msra.mxu0 0.0
        %369 = vmatpush.msra.mxu0 0.0
        %370 = vmatpush.msra.mxu0 0.0
        %371 = vmatpush.msra.mxu0 0.0
        %372 = vmatpush.msra.mxu0 0.0
        %373 = vmatpush.msra.mxu0 0.0
        %374 = vmatpush.msra.mxu0 0.0
        %375 = vmatpush.msra.mxu0 %v318
        %376 = vmatpush.msra.mxu0 %v317
        %377 = vmatpush.msra.mxu0 %v316
        %378 = vmatpush.msra.mxu0 %v315
        %379 = vmatmul.f32.gmra.mxu0 %v361
        %v380 = vpop.f32.mrf.mxu0
        %v381 = vadd.f32 0.0, %v380
        %382 = vdwg.mxu0
        %383 = vst.msk [vmem:[#allocation2 + $0x4] sm:$0xf] %vm353, %v381
        %384 = vst.msk [vmem:[%s355] sm:$0xf0] %vm356, %v381
        %s385 = scalar_lea.vmem %s270, 16 [#allocation3]
        %v386 = vld [vmem:[%s385] sm:$0xff]
        %v388 = vsel %vm329, %v386, 0
        %390 = vmatpush.msra.mxu0 0.0
        %391 = vmatpush.msra.mxu0 0.0
        %392 = vmatpush.msra.mxu0 0.0
        %393 = vmatpush.msra.mxu0 0.0
        %394 = vmatpush.msra.mxu0 0.0
        %395 = vmatpush.msra.mxu0 0.0
        %396 = vmatpush.msra.mxu0 0.0
        %397 = vmatpush.msra.mxu0 0.0
        %398 = vmatpush.msra.mxu0 0.0
        %399 = vmatpush.msra.mxu0 0.0
        %400 = vmatpush.msra.mxu0 0.0
        %401 = vmatpush.msra.mxu0 0.0
        %402 = vmatpush.msra.mxu0 %v318
        %403 = vmatpush.msra.mxu0 %v317
        %404 = vmatpush.msra.mxu0 %v316
        %405 = vmatpush.msra.mxu0 %v315
        %406 = vmatmul.f32.gmra.mxu0 %v388
        %v407 = vpop.f32.mrf.mxu0
        %v408 = vadd.f32 0.0, %v407
        %409 = vdwg.mxu0
        %410 = vst.msk [vmem:[#allocation2 + $0x8] sm:$0xf] %vm353, %v408
        %411 = vst.msk [vmem:[%s355 + $0x4] sm:$0xf0] %vm356, %v408
        %s412 = scalar_lea.vmem %s270, 24 [#allocation3]
        %v413 = vld [vmem:[%s412] sm:$0xff]
        %v415 = vsel %vm329, %v413, 0
        %417 = vmatpush.msra.mxu0 0.0
        %418 = vmatpush.msra.mxu0 0.0
        %419 = vmatpush.msra.mxu0 0.0
        %420 = vmatpush.msra.mxu0 0.0
        %421 = vmatpush.msra.mxu0 0.0
        %422 = vmatpush.msra.mxu0 0.0
        %423 = vmatpush.msra.mxu0 0.0
        %424 = vmatpush.msra.mxu0 0.0
        %425 = vmatpush.msra.mxu0 0.0
        %426 = vmatpush.msra.mxu0 0.0
        %427 = vmatpush.msra.mxu0 0.0
        %428 = vmatpush.msra.mxu0 0.0
        %429 = vmatpush.msra.mxu0 %v318
        %430 = vmatpush.msra.mxu0 %v317
        %431 = vmatpush.msra.mxu0 %v316
        %432 = vmatpush.msra.mxu0 %v315
        %433 = vmatmul.f32.gmra.mxu0 %v415
        %v434 = vpop.f32.mrf.mxu0
        %v435 = vadd.f32 0.0, %v434
        %436 = vdwg.mxu0
        %437 = vst.msk [vmem:[#allocation2 + $0xc] sm:$0xf] %vm353, %v435
        %438 = vst.msk [vmem:[%s355 + $0x8] sm:$0xf0] %vm356, %v435
        %v439 = vld [vmem:[#allocation2] sm:$0xff]
        %v440 = vld [vmem:[#allocation2 + $0x8] sm:$0xff]
        %v441 = vmul.f32 %v439, 0.25
        %v442 = vmul.f32 %v440, 0.25
        %445 = vrot.lane.b32.xlu0 %v439, 96
        %v446 = vpop.permute.xlu0 %445
        %447 = vrot.lane.b32.xlu0 %v440, 96
        %v448 = vpop.permute.xlu0 %447
        %vm449 = vcmask 130048
        %v451 = vsel %vm449, %v441, 0
        %v454 = vsel %vm449, %v442, 0
        %v456 = vsel %vm449, %v446, 0
        %v458 = vsel %vm449, %v448, 0
        %460 = vmatpush.xpose.msra.mxu0 0.0
        %461 = vmatpush.xpose.msra.mxu0 0.0
        %462 = vmatpush.xpose.msra.mxu0 0.0
        %463 = vmatpush.xpose.msra.mxu0 0.0
        %464 = vmatpush.xpose.msra.mxu0 0.0
        %465 = vmatpush.xpose.msra.mxu0 0.0
        %466 = vmatpush.xpose.msra.mxu0 0.0
        %467 = vmatpush.xpose.msra.mxu0 0.0
        %468 = vmatpush.xpose.msra.mxu0 0.0
        %469 = vmatpush.xpose.msra.mxu0 0.0
        %470 = vmatpush.xpose.msra.mxu0 0.0
        %471 = vmatpush.xpose.msra.mxu0 0.0
        %472 = vmatpush.xpose.msra.mxu0 0.0
        %473 = vmatpush.xpose.msra.mxu0 0.0
        %474 = vmatpush.xpose.msra.mxu0 %v458
        %475 = vmatpush.xpose.msra.mxu0 %v456
        %476 = vmatmul.f32.gmra.mxu0 %v451
        %v477 = vpop.f32.mrf.mxu0
        %v478 = vadd.f32 0.0, %v477
        %479 = vmatmul.f32.gmra.mxu0 %v454
        %v480 = vpop.f32.mrf.mxu0
        %v481 = vadd.f32 0.0, %v480
        %482 = vdwg.mxu0
        %v483 = vsel %vm449, %v478, -inf
        %484 = vmax.xlane.f32.xlu0 %v483
        %v485 = vpop.xlane.xlu0 %484
        %v486 = vsel %vm449, %v481, -inf
        %487 = vmax.xlane.f32.xlu0 %v486
        %v488 = vpop.xlane.xlu0 %487
        %v489 = vsub.f32 %v478, %v485
        %v490 = vsub.f32 %v481, %v488
        %v491 = vmul.f32 %v489, 1.442695
        %v492 = vpow.pop %v491
        %v493 = vmul.f32 %v490, 1.442695
        %v494 = vpow.pop %v493
        %v495 = vsel %vm449, %v492, 0.0
        %496 = vadd.xlane.f32.xlu0 %v495
        %v497 = vpop.xlane.xlu0 %496
        %v498 = vsel %vm449, %v494, 0.0
        %499 = vadd.xlane.f32.xlu0 %v498
        %v500 = vpop.xlane.xlu0 %499
        %v501 = vrcp.pop %v497
        %v502 = vmul.f32 %v497, %v501
        %v503 = vsub.f32 1.0, %v502
        %v504 = vmul.f32 %v501, %v503
        %v505 = vadd.f32 %v501, %v504
        %vm506 = vweird.f32 %v497
        %vm507 = vweird.f32 %v501
        %vm508 = vmor %vm506, %vm507
        %v509 = vsel %vm508, %v501, %v505
        %v510 = vand.u32 2147483647, %v497
        %vm511 = vcmp.eq.f32.partialorder %v510, 8.507059e+37
        %v512 = vand.u32 %v497, 2147483648
        %v513 = vor.u32 1.1754944e-38, %v512
        %v514 = vsel %vm511, %v513, %v509
        %v515 = vrcp.pop %v500
        %v516 = vmul.f32 %v500, %v515
        %v517 = vsub.f32 1.0, %v516
        %v518 = vmul.f32 %v515, %v517
        %v519 = vadd.f32 %v515, %v518
        %vm520 = vweird.f32 %v500
        %vm521 = vweird.f32 %v515
        %vm522 = vmor %vm520, %vm521
        %v523 = vsel %vm522, %v515, %v519
        %v524 = vand.u32 2147483647, %v500
        %vm525 = vcmp.eq.f32.partialorder %v524, 8.507059e+37
        %v526 = vand.u32 %v500, 2147483648
        %v527 = vor.u32 1.1754944e-38, %v526
        %v528 = vsel %vm525, %v527, %v523
        %v529 = vmul.f32 %v492, %v514
        %v530 = vmul.f32 %v494, %v528
        %v531 = vadd.f32 %v529, %v324
        %v532 = vadd.f32 %v530, %v325
        %533 = vrot.lane.b32.xlu0 %v439, 64
        %v534 = vpop.permute.xlu0 %533
        %535 = vrot.lane.b32.xlu0 %v440, 64
        %v536 = vpop.permute.xlu0 %535
        %v540 = vsel %vm449, %v531, 0
        %v543 = vsel %vm449, %v532, 0
        %545 = vmatpush.msra.mxu0 0.0
        %546 = vmatpush.msra.mxu0 0.0
        %547 = vmatpush.msra.mxu0 0.0
        %548 = vmatpush.msra.mxu0 0.0
        %549 = vmatpush.msra.mxu0 0.0
        %550 = vmatpush.msra.mxu0 0.0
        %551 = vmatpush.msra.mxu0 0.0
        %552 = vmatpush.msra.mxu0 0.0
        %553 = vmatpush.msra.mxu0 0.0
        %554 = vmatpush.msra.mxu0 0.0
        %555 = vmatpush.msra.mxu0 0.0
        %556 = vmatpush.msra.mxu0 0.0
        %557 = vmatpush.msra.mxu0 0.0
        %558 = vmatpush.msra.mxu0 0.0
        %559 = vmatpush.msra.mxu0 %v536
        %560 = vmatpush.msra.mxu0 %v534
        %561 = vmatmul.f32.gmra.mxu0 %v540
        %v562 = vpop.f32.mrf.mxu0
        %v563 = vadd.f32 0.0, %v562
        %564 = vmatmul.f32.gmra.mxu0 %v543
        %v565 = vpop.f32.mrf.mxu0
        %v566 = vadd.f32 0.0, %v565
        %567 = vdwg.mxu0
        %568 = vrot.lane.b32.xlu0 %v441, 112
        %v569 = vpop.permute.xlu0 %568
        %570 = vrot.lane.b32.xlu0 %v442, 112
        %v571 = vpop.permute.xlu0 %570
        %572 = vrot.lane.b32.xlu0 %v439, 80
        %v573 = vpop.permute.xlu0 %572
        %574 = vrot.lane.b32.xlu0 %v440, 80
        %v575 = vpop.permute.xlu0 %574
        %v576 = vsel %vm449, %v569, 0
        %v578 = vsel %vm449, %v571, 0
        %v580 = vsel %vm449, %v573, 0
        %v582 = vsel %vm449, %v575, 0
        %584 = vmatpush.xpose.msra.mxu0 0.0
        %585 = vmatpush.xpose.msra.mxu0 0.0
        %586 = vmatpush.xpose.msra.mxu0 0.0
        %587 = vmatpush.xpose.msra.mxu0 0.0
        %588 = vmatpush.xpose.msra.mxu0 0.0
        %589 = vmatpush.xpose.msra.mxu0 0.0
        %590 = vmatpush.xpose.msra.mxu0 0.0
        %591 = vmatpush.xpose.msra.mxu0 0.0
        %592 = vmatpush.xpose.msra.mxu0 0.0
        %593 = vmatpush.xpose.msra.mxu0 0.0
        %594 = vmatpush.xpose.msra.mxu0 0.0
        %595 = vmatpush.xpose.msra.mxu0 0.0
        %596 = vmatpush.xpose.msra.mxu0 0.0
        %597 = vmatpush.xpose.msra.mxu0 0.0
        %598 = vmatpush.xpose.msra.mxu0 %v582
        %599 = vmatpush.xpose.msra.mxu0 %v580
        %600 = vmatmul.f32.gmra.mxu0 %v576
        %v601 = vpop.f32.mrf.mxu0
        %v602 = vadd.f32 0.0, %v601
        %603 = vmatmul.f32.gmra.mxu0 %v578
        %v604 = vpop.f32.mrf.mxu0
        %v605 = vadd.f32 0.0, %v604
        %606 = vdwg.mxu0
        %v607 = vsel %vm449, %v602, -inf
        %608 = vmax.xlane.f32.xlu0 %v607
        %v609 = vpop.xlane.xlu0 %608
        %v610 = vsel %vm449, %v605, -inf
        %611 = vmax.xlane.f32.xlu0 %v610
        %v612 = vpop.xlane.xlu0 %611
        %v613 = vsub.f32 %v602, %v609
        %v614 = vsub.f32 %v605, %v612
        %v615 = vmul.f32 %v613, 1.442695
        %v616 = vpow.pop %v615
        %v617 = vmul.f32 %v614, 1.442695
        %v618 = vpow.pop %v617
        %v619 = vsel %vm449, %v616, 0.0
        %620 = vadd.xlane.f32.xlu0 %v619
        %v621 = vpop.xlane.xlu0 %620
        %v622 = vsel %vm449, %v618, 0.0
        %623 = vadd.xlane.f32.xlu0 %v622
        %v624 = vpop.xlane.xlu0 %623
        %v625 = vrcp.pop %v621
        %v626 = vmul.f32 %v621, %v625
        %v627 = vsub.f32 1.0, %v626
        %v628 = vmul.f32 %v625, %v627
        %v629 = vadd.f32 %v625, %v628
        %vm630 = vweird.f32 %v621
        %vm631 = vweird.f32 %v625
        %vm632 = vmor %vm630, %vm631
        %v633 = vsel %vm632, %v625, %v629
        %v634 = vand.u32 2147483647, %v621
        %vm635 = vcmp.eq.f32.partialorder %v634, 8.507059e+37
        %v636 = vand.u32 %v621, 2147483648
        %v637 = vor.u32 1.1754944e-38, %v636
        %v638 = vsel %vm635, %v637, %v633
        %v639 = vrcp.pop %v624
        %v640 = vmul.f32 %v624, %v639
        %v641 = vsub.f32 1.0, %v640
        %v642 = vmul.f32 %v639, %v641
        %v643 = vadd.f32 %v639, %v642
        %vm644 = vweird.f32 %v624
        %vm645 = vweird.f32 %v639
        %vm646 = vmor %vm644, %vm645
        %v647 = vsel %vm646, %v639, %v643
        %v648 = vand.u32 2147483647, %v624
        %vm649 = vcmp.eq.f32.partialorder %v648, 8.507059e+37
        %v650 = vand.u32 %v624, 2147483648
        %v651 = vor.u32 1.1754944e-38, %v650
        %v652 = vsel %vm649, %v651, %v647
        %v653 = vmul.f32 %v616, %v638
        %v654 = vmul.f32 %v618, %v652
        %v655 = vadd.f32 %v653, %v326
        %v656 = vadd.f32 %v654, %v327
        %657 = vrot.lane.b32.xlu0 %v439, 48
        %v658 = vpop.permute.xlu0 %657
        %659 = vrot.lane.b32.xlu0 %v440, 48
        %v660 = vpop.permute.xlu0 %659
        %v664 = vsel %vm449, %v655, 0
        %v667 = vsel %vm449, %v656, 0
        %669 = vmatpush.msra.mxu0 0.0
        %670 = vmatpush.msra.mxu0 0.0
        %671 = vmatpush.msra.mxu0 0.0
        %672 = vmatpush.msra.mxu0 0.0
        %673 = vmatpush.msra.mxu0 0.0
        %674 = vmatpush.msra.mxu0 0.0
        %675 = vmatpush.msra.mxu0 0.0
        %676 = vmatpush.msra.mxu0 0.0
        %677 = vmatpush.msra.mxu0 0.0
        %678 = vmatpush.msra.mxu0 0.0
        %679 = vmatpush.msra.mxu0 0.0
        %680 = vmatpush.msra.mxu0 0.0
        %681 = vmatpush.msra.mxu0 0.0
        %682 = vmatpush.msra.mxu0 0.0
        %683 = vmatpush.msra.mxu0 %v660
        %684 = vmatpush.msra.mxu0 %v658
        %685 = vmatmul.f32.gmra.mxu0 %v664
        %v686 = vpop.f32.mrf.mxu0
        %v687 = vadd.f32 0.0, %v686
        %688 = vmatmul.f32.gmra.mxu0 %v667
        %v689 = vpop.f32.mrf.mxu0
        %v690 = vadd.f32 0.0, %v689
        %691 = vdwg.mxu0
        %v693 = vsel %vm449, %v687, 0
        %v696 = vsel %vm449, %v690, 0
        %698 = vmatpush.msra.mxu0 0.0
        %699 = vmatpush.msra.mxu0 0.0
        %700 = vmatpush.msra.mxu0 0.0
        %701 = vmatpush.msra.mxu0 0.0
        %702 = vmatpush.msra.mxu0 0.0
        %703 = vmatpush.msra.mxu0 0.0
        %704 = vmatpush.msra.mxu0 0.0
        %705 = vmatpush.msra.mxu0 0.0
        %706 = vmatpush.msra.mxu0 0.0
        %707 = vmatpush.msra.mxu0 0.0
        %708 = vmatpush.msra.mxu0 0.0
        %709 = vmatpush.msra.mxu0 0.0
        %710 = vmatpush.msra.mxu0 0.0
        %711 = vmatpush.msra.mxu0 0.0
        %712 = vmatpush.msra.mxu0 %v322
        %713 = vmatpush.msra.mxu0 %v321
        %714 = vmatmul.f32.gmra.mxu0 %v693
        %v715 = vpop.f32.mrf.mxu0
        %v716 = vadd.f32 0.0, %v715
        %717 = vmatmul.f32.gmra.mxu0 %v696
        %v718 = vpop.f32.mrf.mxu0
        %v719 = vadd.f32 0.0, %v718
        %720 = vdwg.mxu0
        %v722 = vsel %vm449, %v563, 0
        %v725 = vsel %vm449, %v566, 0
        %727 = vmatpush.msra.mxu0 0.0
        %728 = vmatpush.msra.mxu0 0.0
        %729 = vmatpush.msra.mxu0 0.0
        %730 = vmatpush.msra.mxu0 0.0
        %731 = vmatpush.msra.mxu0 0.0
        %732 = vmatpush.msra.mxu0 0.0
        %733 = vmatpush.msra.mxu0 0.0
        %734 = vmatpush.msra.mxu0 0.0
        %735 = vmatpush.msra.mxu0 0.0
        %736 = vmatpush.msra.mxu0 0.0
        %737 = vmatpush.msra.mxu0 0.0
        %738 = vmatpush.msra.mxu0 0.0
        %739 = vmatpush.msra.mxu0 0.0
        %740 = vmatpush.msra.mxu0 0.0
        %741 = vmatpush.msra.mxu0 %v320
        %742 = vmatpush.msra.mxu0 %v319
        %743 = vmatmul.f32.gmra.mxu0 %v722
        %v744 = vpop.f32.mrf.mxu0
        %v745 = vadd.f32 %v716, %v744
        %746 = vmatmul.f32.gmra.mxu0 %v725
        %v747 = vpop.f32.mrf.mxu0
        %v748 = vadd.f32 %v719, %v747
        %749 = vdwg.mxu0
        %v751 = vperm.slane %v323, 0
        %v753 = vadd.f32 %v745, %v751
        %v754 = vadd.f32 %v748, %v751
        %vm755 = vcmask 257024
        %756 = vst.msk [vmem:[%s312] sm:$0xf] %vm755, %v753
        %s757 = scalar_lea.vmem %s312, 8 [#allocation11]
        %vm758 = vcmask 261124
        %759 = vst.msk [vmem:[%s757 - $0x4] sm:$0xf0] %vm758, %v753
        %s760 = scalar_lea.vmem %s312, 16 [#allocation11]
        %761 = vst.msk [vmem:[%s760] sm:$0xf] %vm755, %v754
        %s762 = scalar_lea.vmem %s312, 24 [#allocation11]
        %763 = vst.msk [vmem:[%s762 - $0x4] sm:$0xf0] %vm758, %v754
        %v764 = vld [vmem:[%s355] sm:$0xff]
        %v765 = vld [vmem:[%s355 + $0x8] sm:$0xff]
        %v766 = vmul.f32 %v764, 0.25
        %v767 = vmul.f32 %v765, 0.25
        %770 = vrot.lane.b32.xlu0 %v764, 96
        %v771 = vpop.permute.xlu0 %770
        %772 = vrot.lane.b32.xlu0 %v765, 96
        %v773 = vpop.permute.xlu0 %772
        %v775 = vsel %vm449, %v766, 0
        %v778 = vsel %vm449, %v767, 0
        %v780 = vsel %vm449, %v771, 0
        %v782 = vsel %vm449, %v773, 0
        %784 = vmatpush.xpose.msra.mxu0 0.0
        %785 = vmatpush.xpose.msra.mxu0 0.0
        %786 = vmatpush.xpose.msra.mxu0 0.0
        %787 = vmatpush.xpose.msra.mxu0 0.0
        %788 = vmatpush.xpose.msra.mxu0 0.0
        %789 = vmatpush.xpose.msra.mxu0 0.0
        %790 = vmatpush.xpose.msra.mxu0 0.0
        %791 = vmatpush.xpose.msra.mxu0 0.0
        %792 = vmatpush.xpose.msra.mxu0 0.0
        %793 = vmatpush.xpose.msra.mxu0 0.0
        %794 = vmatpush.xpose.msra.mxu0 0.0
        %795 = vmatpush.xpose.msra.mxu0 0.0
        %796 = vmatpush.xpose.msra.mxu0 0.0
        %797 = vmatpush.xpose.msra.mxu0 0.0
        %798 = vmatpush.xpose.msra.mxu0 %v782
        %799 = vmatpush.xpose.msra.mxu0 %v780
        %800 = vmatmul.f32.gmra.mxu0 %v775
        %v801 = vpop.f32.mrf.mxu0
        %v802 = vadd.f32 0.0, %v801
        %803 = vmatmul.f32.gmra.mxu0 %v778
        %v804 = vpop.f32.mrf.mxu0
        %v805 = vadd.f32 0.0, %v804
        %806 = vdwg.mxu0
        %v807 = vsel %vm449, %v802, -inf
        %808 = vmax.xlane.f32.xlu0 %v807
        %v809 = vpop.xlane.xlu0 %808
        %v810 = vsel %vm449, %v805, -inf
        %811 = vmax.xlane.f32.xlu0 %v810
        %v812 = vpop.xlane.xlu0 %811
        %v813 = vsub.f32 %v802, %v809
        %v814 = vsub.f32 %v805, %v812
        %v815 = vmul.f32 %v813, 1.442695
        %v816 = vpow.pop %v815
        %v817 = vmul.f32 %v814, 1.442695
        %v818 = vpow.pop %v817
        %v819 = vsel %vm449, %v816, 0.0
        %820 = vadd.xlane.f32.xlu0 %v819
        %v821 = vpop.xlane.xlu0 %820
        %v822 = vsel %vm449, %v818, 0.0
        %823 = vadd.xlane.f32.xlu0 %v822
        %v824 = vpop.xlane.xlu0 %823
        %v825 = vrcp.pop %v821
        %v826 = vmul.f32 %v821, %v825
        %v827 = vsub.f32 1.0, %v826
        %v828 = vmul.f32 %v825, %v827
        %v829 = vadd.f32 %v825, %v828
        %vm830 = vweird.f32 %v821
        %vm831 = vweird.f32 %v825
        %vm832 = vmor %vm830, %vm831
        %v833 = vsel %vm832, %v825, %v829
        %v834 = vand.u32 2147483647, %v821
        %vm835 = vcmp.eq.f32.partialorder %v834, 8.507059e+37
        %v836 = vand.u32 %v821, 2147483648
        %v837 = vor.u32 1.1754944e-38, %v836
        %v838 = vsel %vm835, %v837, %v833
        %v839 = vrcp.pop %v824
        %v840 = vmul.f32 %v824, %v839
        %v841 = vsub.f32 1.0, %v840
        %v842 = vmul.f32 %v839, %v841
        %v843 = vadd.f32 %v839, %v842
        %vm844 = vweird.f32 %v824
        %vm845 = vweird.f32 %v839
        %vm846 = vmor %vm844, %vm845
        %v847 = vsel %vm846, %v839, %v843
        %v848 = vand.u32 2147483647, %v824
        %vm849 = vcmp.eq.f32.partialorder %v848, 8.507059e+37
        %v850 = vand.u32 %v824, 2147483648
        %v851 = vor.u32 1.1754944e-38, %v850
        %v852 = vsel %vm849, %v851, %v847
        %v853 = vmul.f32 %v816, %v838
        %v854 = vmul.f32 %v818, %v852
        %v855 = vadd.f32 %v853, %v324
        %v856 = vadd.f32 %v854, %v325
        %857 = vrot.lane.b32.xlu0 %v764, 64
        %v858 = vpop.permute.xlu0 %857
        %859 = vrot.lane.b32.xlu0 %v765, 64
        %v860 = vpop.permute.xlu0 %859
        %v864 = vsel %vm449, %v855, 0
        %v867 = vsel %vm449, %v856, 0
        %869 = vmatpush.msra.mxu0 0.0
        %870 = vmatpush.msra.mxu0 0.0
        %871 = vmatpush.msra.mxu0 0.0
        %872 = vmatpush.msra.mxu0 0.0
        %873 = vmatpush.msra.mxu0 0.0
        %874 = vmatpush.msra.mxu0 0.0
        %875 = vmatpush.msra.mxu0 0.0
        %876 = vmatpush.msra.mxu0 0.0
        %877 = vmatpush.msra.mxu0 0.0
        %878 = vmatpush.msra.mxu0 0.0
        %879 = vmatpush.msra.mxu0 0.0
        %880 = vmatpush.msra.mxu0 0.0
        %881 = vmatpush.msra.mxu0 0.0
        %882 = vmatpush.msra.mxu0 0.0
        %883 = vmatpush.msra.mxu0 %v860
        %884 = vmatpush.msra.mxu0 %v858
        %885 = vmatmul.f32.gmra.mxu0 %v864
        %v886 = vpop.f32.mrf.mxu0
        %v887 = vadd.f32 0.0, %v886
        %888 = vmatmul.f32.gmra.mxu0 %v867
        %v889 = vpop.f32.mrf.mxu0
        %v890 = vadd.f32 0.0, %v889
        %891 = vdwg.mxu0
        %892 = vrot.lane.b32.xlu0 %v766, 112
        %v893 = vpop.permute.xlu0 %892
        %894 = vrot.lane.b32.xlu0 %v767, 112
        %v895 = vpop.permute.xlu0 %894
        %896 = vrot.lane.b32.xlu0 %v764, 80
        %v897 = vpop.permute.xlu0 %896
        %898 = vrot.lane.b32.xlu0 %v765, 80
        %v899 = vpop.permute.xlu0 %898
        %v900 = vsel %vm449, %v893, 0
        %v902 = vsel %vm449, %v895, 0
        %v904 = vsel %vm449, %v897, 0
        %v906 = vsel %vm449, %v899, 0
        %908 = vmatpush.xpose.msra.mxu0 0.0
        %909 = vmatpush.xpose.msra.mxu0 0.0
        %910 = vmatpush.xpose.msra.mxu0 0.0
        %911 = vmatpush.xpose.msra.mxu0 0.0
        %912 = vmatpush.xpose.msra.mxu0 0.0
        %913 = vmatpush.xpose.msra.mxu0 0.0
        %914 = vmatpush.xpose.msra.mxu0 0.0
        %915 = vmatpush.xpose.msra.mxu0 0.0
        %916 = vmatpush.xpose.msra.mxu0 0.0
        %917 = vmatpush.xpose.msra.mxu0 0.0
        %918 = vmatpush.xpose.msra.mxu0 0.0
        %919 = vmatpush.xpose.msra.mxu0 0.0
        %920 = vmatpush.xpose.msra.mxu0 0.0
        %921 = vmatpush.xpose.msra.mxu0 0.0
        %922 = vmatpush.xpose.msra.mxu0 %v906
        %923 = vmatpush.xpose.msra.mxu0 %v904
        %924 = vmatmul.f32.gmra.mxu0 %v900
        %v925 = vpop.f32.mrf.mxu0
        %v926 = vadd.f32 0.0, %v925
        %927 = vmatmul.f32.gmra.mxu0 %v902
        %v928 = vpop.f32.mrf.mxu0
        %v929 = vadd.f32 0.0, %v928
        %930 = vdwg.mxu0
        %v931 = vsel %vm449, %v926, -inf
        %932 = vmax.xlane.f32.xlu0 %v931
        %v933 = vpop.xlane.xlu0 %932
        %v934 = vsel %vm449, %v929, -inf
        %935 = vmax.xlane.f32.xlu0 %v934
        %v936 = vpop.xlane.xlu0 %935
        %v937 = vsub.f32 %v926, %v933
        %v938 = vsub.f32 %v929, %v936
        %v939 = vmul.f32 %v937, 1.442695
        %v940 = vpow.pop %v939
        %v941 = vmul.f32 %v938, 1.442695
        %v942 = vpow.pop %v941
        %v943 = vsel %vm449, %v940, 0.0
        %944 = vadd.xlane.f32.xlu0 %v943
        %v945 = vpop.xlane.xlu0 %944
        %v946 = vsel %vm449, %v942, 0.0
        %947 = vadd.xlane.f32.xlu0 %v946
        %v948 = vpop.xlane.xlu0 %947
        %v949 = vrcp.pop %v945
        %v950 = vmul.f32 %v945, %v949
        %v951 = vsub.f32 1.0, %v950
        %v952 = vmul.f32 %v949, %v951
        %v953 = vadd.f32 %v949, %v952
        %vm954 = vweird.f32 %v945
        %vm955 = vweird.f32 %v949
        %vm956 = vmor %vm954, %vm955
        %v957 = vsel %vm956, %v949, %v953
        %v958 = vand.u32 2147483647, %v945
        %vm959 = vcmp.eq.f32.partialorder %v958, 8.507059e+37
        %v960 = vand.u32 %v945, 2147483648
        %v961 = vor.u32 1.1754944e-38, %v960
        %v962 = vsel %vm959, %v961, %v957
        %v963 = vrcp.pop %v948
        %v964 = vmul.f32 %v948, %v963
        %v965 = vsub.f32 1.0, %v964
        %v966 = vmul.f32 %v963, %v965
        %v967 = vadd.f32 %v963, %v966
        %vm968 = vweird.f32 %v948
        %vm969 = vweird.f32 %v963
        %vm970 = vmor %vm968, %vm969
        %v971 = vsel %vm970, %v963, %v967
        %v972 = vand.u32 2147483647, %v948
        %vm973 = vcmp.eq.f32.partialorder %v972, 8.507059e+37
        %v974 = vand.u32 %v948, 2147483648
        %v975 = vor.u32 1.1754944e-38, %v974
        %v976 = vsel %vm973, %v975, %v971
        %v977 = vmul.f32 %v940, %v962
        %v978 = vmul.f32 %v942, %v976
        %v979 = vadd.f32 %v977, %v326
        %v980 = vadd.f32 %v978, %v327
        %981 = vrot.lane.b32.xlu0 %v764, 48
        %v982 = vpop.permute.xlu0 %981
        %983 = vrot.lane.b32.xlu0 %v765, 48
        %v984 = vpop.permute.xlu0 %983
        %v988 = vsel %vm449, %v979, 0
        %v991 = vsel %vm449, %v980, 0
        %993 = vmatpush.msra.mxu0 0.0
        %994 = vmatpush.msra.mxu0 0.0
        %995 = vmatpush.msra.mxu0 0.0
        %996 = vmatpush.msra.mxu0 0.0
        %997 = vmatpush.msra.mxu0 0.0
        %998 = vmatpush.msra.mxu0 0.0
        %999 = vmatpush.msra.mxu0 0.0
        %1000 = vmatpush.msra.mxu0 0.0
        %1001 = vmatpush.msra.mxu0 0.0
        %1002 = vmatpush.msra.mxu0 0.0
        %1003 = vmatpush.msra.mxu0 0.0
        %1004 = vmatpush.msra.mxu0 0.0
        %1005 = vmatpush.msra.mxu0 0.0
        %1006 = vmatpush.msra.mxu0 0.0
        %1007 = vmatpush.msra.mxu0 %v984
        %1008 = vmatpush.msra.mxu0 %v982
        %1009 = vmatmul.f32.gmra.mxu0 %v988
        %v1010 = vpop.f32.mrf.mxu0
        %v1011 = vadd.f32 0.0, %v1010
        %1012 = vmatmul.f32.gmra.mxu0 %v991
        %v1013 = vpop.f32.mrf.mxu0
        %v1014 = vadd.f32 0.0, %v1013
        %1015 = vdwg.mxu0
        %v1017 = vsel %vm449, %v1011, 0
        %v1020 = vsel %vm449, %v1014, 0
        %1022 = vmatpush.msra.mxu0 0.0
        %1023 = vmatpush.msra.mxu0 0.0
        %1024 = vmatpush.msra.mxu0 0.0
        %1025 = vmatpush.msra.mxu0 0.0
        %1026 = vmatpush.msra.mxu0 0.0
        %1027 = vmatpush.msra.mxu0 0.0
        %1028 = vmatpush.msra.mxu0 0.0
        %1029 = vmatpush.msra.mxu0 0.0
        %1030 = vmatpush.msra.mxu0 0.0
        %1031 = vmatpush.msra.mxu0 0.0
        %1032 = vmatpush.msra.mxu0 0.0
        %1033 = vmatpush.msra.mxu0 0.0
        %1034 = vmatpush.msra.mxu0 0.0
        %1035 = vmatpush.msra.mxu0 0.0
        %1036 = vmatpush.msra.mxu0 %v322
        %1037 = vmatpush.msra.mxu0 %v321
        %1038 = vmatmul.f32.gmra.mxu0 %v1017
        %v1039 = vpop.f32.mrf.mxu0
        %v1040 = vadd.f32 0.0, %v1039
        %1041 = vmatmul.f32.gmra.mxu0 %v1020
        %v1042 = vpop.f32.mrf.mxu0
        %v1043 = vadd.f32 0.0, %v1042
        %1044 = vdwg.mxu0
        %v1046 = vsel %vm449, %v887, 0
        %v1049 = vsel %vm449, %v890, 0
        %1051 = vmatpush.msra.mxu0 0.0
        %1052 = vmatpush.msra.mxu0 0.0
        %1053 = vmatpush.msra.mxu0 0.0
        %1054 = vmatpush.msra.mxu0 0.0
        %1055 = vmatpush.msra.mxu0 0.0
        %1056 = vmatpush.msra.mxu0 0.0
        %1057 = vmatpush.msra.mxu0 0.0
        %1058 = vmatpush.msra.mxu0 0.0
        %1059 = vmatpush.msra.mxu0 0.0
        %1060 = vmatpush.msra.mxu0 0.0
        %1061 = vmatpush.msra.mxu0 0.0
        %1062 = vmatpush.msra.mxu0 0.0
        %1063 = vmatpush.msra.mxu0 0.0
        %1064 = vmatpush.msra.mxu0 0.0
        %1065 = vmatpush.msra.mxu0 %v320
        %1066 = vmatpush.msra.mxu0 %v319
        %1067 = vmatmul.f32.gmra.mxu0 %v1046
        %v1068 = vpop.f32.mrf.mxu0
        %v1069 = vadd.f32 %v1040, %v1068
        %1070 = vmatmul.f32.gmra.mxu0 %v1049
        %v1071 = vpop.f32.mrf.mxu0
        %v1072 = vadd.f32 %v1043, %v1071
        %1073 = vdwg.mxu0
        %v1074 = vadd.f32 %v1069, %v751
        %v1075 = vadd.f32 %v1072, %v751
        %1076 = vst.msk [vmem:[%s312 + $0x4] sm:$0xf] %vm755, %v1074
        %1077 = vst.msk [vmem:[%s757] sm:$0xf0] %vm758, %v1074
        %1078 = vst.msk [vmem:[%s760 + $0x4] sm:$0xf] %vm755, %v1075
        %1079 = vst.msk [vmem:[%s762] sm:$0xf0] %vm758, %v1075
        %s1080 = sand.u32 %s158, 1
        %s1081 = scalar_lea.sflag [#allocation5], %s1080
        %s1082 = sand.u32 %s158, 1
        %s1083 = smul.addr %s1082, 32
        %s1084 = scalar_lea.vmem [#allocation11], %s1083
        // Predicated region
        $region57: #{tpu_custom_call.1} parent=39 // pred_check
          %p1085 = pneg %p168
        $region58: #{tpu_custom_call.1} parent=39 // pred_check_branch
          %1087 = sbr.rel (%p1085) target = $region60
        $region59: #{tpu_custom_call.1} parent=39 // pred_region
          %s1088 = smul.u32 4, %s29
          %1090 = vsyncadd %s1081, 0
          %s1091 = smul.addr %s28, 8
          %s1092 = sadd.s32 %s1088, %s1091
          %s1093 = smul.addr %s1092, 8
          %s1094 = scalar_lea.hbm %s5, %s1093
          %s1095 = sshll.u32 %s1084, 4
          %s1096 = int_to_ptr.vmem [resolvable:$true] %s1095
          %s1097 = sshll.u32 %s1094, 4
          %s1098 = int_to_ptr.hbm [resolvable:$true] %s1097
          %1103 = dma.vmem_to_hbm [thread:$0]  %s1096, 512, %s1098, %s1081, 128, 128, 8
        $region60: #{tpu_custom_call.1} parent=39 // pred_fallthru
          _
      $region40: #{tpu_custom_call.1} parent=5 // pred_fallthru
        _
      %p1104 = scmp.le.s32.totalorder 2, %s19
      // Predicated region
      $region61: #{tpu_custom_call.1} parent=5 // pred_check
        %p1105 = pneg %p1104
      $region62: #{tpu_custom_call.1} parent=5 // pred_check_branch
        %1107 = sbr.rel (%p1105) target = $region64
      $region63: #{tpu_custom_call.1} parent=5 // pred_region
        %s1108 = ssub.s32 %s19, 2
        // Predicated region
        $region65: #{tpu_custom_call.1} parent=63 // pred_check
          %p1109 = pneg %p174
        $region66: #{tpu_custom_call.1} parent=63 // pred_check_branch
          %1111 = sbr.rel (%p1109) target = $region68
        $region67: #{tpu_custom_call.1} parent=63 // pred_region
          %s1112 = sand.u32 %s159, 1
          %s1113 = scalar_lea.sflag [#allocation5], %s1112
          %s1114 = sand.u32 %s159, 1
          %s1115 = smul.addr %s1114, 32
          %s1116 = scalar_lea.vmem [#allocation11], %s1115
          %1118 = dma.done %s1113, 512
        $region68: #{tpu_custom_call.1} parent=63 // pred_fallthru
          _
      $region64: #{tpu_custom_call.1} parent=5 // pred_fallthru
        _
    $region6: #{tpu_custom_call.1} parent=1 // loop_footer
      %s23 = sadd.s32 1, %s19
    $region7: #{tpu_custom_call.1} parent=1 // loop_footer_branch
      %18 = sbr.rel target = $region3
    $region8: #{tpu_custom_call.1} parent=1 // loop_exit
      _
    %1119 = vsyncpa [#allocation4], 1
    %s1120 = scalar_lea.sflag [#allocation4], 1
    %1121 = vsyncpa %s1120, 1
    %1122 = vsyncpa [#allocation7], 1
    %1123 = vsyncpa [#allocation10], 1
    %1124 = vsyncpa [#allocation5], 1
    %s1125 = scalar_lea.sflag [#allocation5], 1
    %1126 = vsyncpa %s1125, 1

</llo_original>
